<compile_context>
chip_gen: v6e
topology: v6e:2x2x1
jax: 0.10.0
libtpu: 0.0.40
codegen_flags: <defaults>
</compile_context>

<pallas_src>
import functools
import math

import jax
import jax.numpy as jnp
import numpy as np
from jax.experimental import pallas as pl
from jax.experimental.pallas import tpu as pltpu


def _crf_kernel(feat_a_ref, feat_b_ref, unary_ref, s_ref, out_ref, m_ref, *,
                num_iter, bf_scale, normalize_final_iter, col_tile):
    """CRF mean-field inference for one batch element.

    feat_a (P, Dp) / feat_b (Dp, P) are augmented so that one MXU matmul gives
        (Fa @ Fb)[p, q] = -0.5 * ||f_p - f_q||^2 + log(compat_bf)
    hence exp() of it is the compat_bf-scaled dense bilateral ("gfilt") matrix.
    s_ref holds the compat_spatial-scaled dense spatial Gaussian.  The fused
    operator M is built per column tile straight into the VMEM scratch m_ref
    (no full-size f32 temporaries), then reused by every iteration:
        q_hat = U + q @ M.
    """
    P = m_ref.shape[0]
    fa = feat_a_ref[0]                       # (P, Dp)  f32, Dp = 128 lane-dense

    # ---- build fused pairwise operator, one column tile at a time ----------
    n_tiles = P // col_tile
    for t in range(n_tiles):
        lo, hi = t * col_tile, (t + 1) * col_tile
        # Keep this matmul in f32: the augmented form relies on cancellation of
        # large ||f||^2 terms.  Runs once per image, off the hot loop.
        logb = jnp.dot(fa, feat_b_ref[0, :, lo:hi],
                       preferred_element_type=jnp.float32)      # (P, tile) f32
        bilat = jnp.exp(logb)                # EUP; == compat_bf * B (bias fold)
        if bf_scale != 1.0:                  # only if compat_bf was not folded
            bilat = bilat * bf_scale
        m_ref[:, lo:hi] = (bilat + s_ref[:, lo:hi]).astype(m_ref.dtype)

    u = jnp.log(jnp.clip(unary_ref[0], 1e-5, 1.0))              # (C, P)

    def _softmax_labels(x):                  # exact softmax over labels (axis 0)
        mx = jnp.max(x, axis=0, keepdims=True)
        e = jnp.exp(x - mx)
        return e / jnp.sum(e, axis=0, keepdims=True)

    q = _softmax_labels(u)
    # TODO(synk): with C << P each iteration is weight-push bound (pushing the
    # PxP RHS costs ~P cycles vs ~C cycles of LHS streaming).  Latching M in
    # the MXU staging registers across iterations (pltpu.matmul_push_rhs once +
    # matmul_acc_lhs / matmul_pop per iteration) would remove num_iter-1 of the
    # pushes; kept on jnp.dot with a loop-invariant RHS (hoistable by Mosaic)
    # because the explicit MXU path is not portable across v5e/v6e/v7x tiles.
    for i in range(num_iter):
        msg = jnp.dot(q, m_ref[...], preferred_element_type=jnp.float32)
        q_hat = u + msg
        if i < num_iter - 1 or normalize_final_iter:
            q = _softmax_labels(q_hat)
        else:
            q = q_hat
    out_ref[0] = q.astype(out_ref.dtype)


@functools.lru_cache(maxsize=None)
def _spatial_matrix_np(h, w, sxy_spatial):
    """Dense (P, P) equivalent of conv2d(q, gkern(sxy_spatial, C), pad=k//2).

    Returns a host-side NumPy array (NOT a jnp array): caching a jnp constant
    created inside a jit trace leaked a tracer in the previous version.
    """
    sig_sq = float(sxy_spatial) ** 2
    r = sig_sq if sig_sq % 2 else sig_sq - 1
    r = int(r)
    d = np.arange(-r, r + 1, dtype=np.float64)
    ksum = np.sum(np.exp(-(d[:, None] ** 2 + d[None, :] ** 2) / (2.0 * sig_sq)))
    py = np.repeat(np.arange(h, dtype=np.float64), w)            # (P,)
    px = np.tile(np.arange(w, dtype=np.float64), h)              # (P,)
    dy = py[:, None] - py[None, :]
    dx = px[:, None] - px[None, :]
    inside = (np.abs(dy) <= r) & (np.abs(dx) <= r)               # truncated, zero-padded
    s = np.where(inside, np.exp(-(dy * dy + dx * dx) / (2.0 * sig_sq)) / ksum, 0.0)
    return np.asarray(s, np.float32)                             # (P, P), symmetric


def _vmem_limit_bytes(pp, dp, c, col_tile):
    """Size the VMEM budget from P instead of a fixed 32 MiB, with a
    per-generation cap (leave ~20% headroom of physical VMEM)."""
    m_bytes = pp * pp * 4                        # fused operator scratch (f32)
    s_bytes = pp * pp * 4                        # S, single-buffered
    feat_bytes = 2 * 2 * pp * dp * 4             # feat_a + feat_b, double-buffered
    io_bytes = 2 * 2 * c * pp * 4                # unary + out, double-buffered
    tile_tmp = 3 * pp * col_tile * 4             # per-tile logb / exp temporaries
    need = m_bytes + s_bytes + feat_bytes + io_bytes + tile_tmp + (4 << 20)
    try:
        cap = int(pltpu.get_tpu_info().vmem_capacity_bytes)      # 64 MiB on v7x
    except Exception:                                            # noqa: BLE001
        cap = 128 * 1024 * 1024                                  # v5e / v6e
    return int(max(32 * 1024 * 1024, min(need, int(cap * 0.8))))


@functools.partial(jax.jit, static_argnames=(
    "sxy_bf", "sc_bf", "compat_bf", "sxy_spatial", "compat_spatial",
    "num_iter", "normalize_final_iter"))
def crf_forward(unary, ref, *, sxy_bf=70.0, sc_bf=12.0, compat_bf=4.0,
                sxy_spatial=6.0, compat_spatial=2.0, num_iter=5,
                normalize_final_iter=True):
    """JAX/Pallas equivalent of CRF.forward(unary, ref).  NCHW in, NCHW out."""
    unary = unary.astype(jnp.float32)
    ref = ref.astype(jnp.float32)
    N, C, H, W = unary.shape
    n_ref = ref.shape[1]
    P = H * W
    Pp = ((P + 127) // 128) * 128                # lane-dense pixel dim
    DP = 128                                     # contraction dim padded to a full lane

    # ---- features [y, x, ref...] / kstd (matches mgrid + cat + kstd) --------
    y = jnp.broadcast_to(jnp.arange(H, dtype=jnp.float32)[:, None], (H, W))
    x = jnp.broadcast_to(jnp.arange(W, dtype=jnp.float32)[None, :], (H, W))
    grid = jnp.broadcast_to(jnp.stack([y, x], axis=0)[None], (N, 2, H, W))
    stacked = jnp.concatenate([grid, ref], axis=1)               # (N, 2+n_ref, H, W)
    kstd = jnp.array([sxy_bf, sxy_bf] + [sc_bf] * n_ref, jnp.float32)
    feat = (stacked / kstd[None, :, None, None]).reshape(N, -1, P)   # (N, D, P)
    # Centering is exact for B (depends only on pairwise differences) and
    # shrinks the ||f||^2 terms cancelled by the augmented-dot trick.
    feat = feat - jnp.mean(feat, axis=2, keepdims=True)
    if Pp != P:
        # padded (fake) pixels get far-away features -> bilateral weight == 0
        feat = jnp.pad(feat, ((0, 0), (0, 0), (0, Pp - P)), constant_values=1e3)
    D = feat.shape[1]

    # Augmented features:  Fa[p] . Fb[:, q] = -0.5||f_p - f_q||^2 + log(compat_bf)
    sq = 0.5 * jnp.sum(feat * feat, axis=1, keepdims=True)       # (N, 1, Pp)
    ones = jnp.ones_like(sq)
    if compat_bf > 0:
        bias_a = -sq + math.log(float(compat_bf))
        bf_scale = 1.0
    else:                                                        # fallback: scale in-kernel
        bias_a = -sq
        bf_scale = float(compat_bf)
    feat_a = jnp.concatenate([feat, bias_a, ones], axis=1)       # (N, D+2, Pp)
    feat_b = jnp.concatenate([feat, ones, -sq], axis=1)          # (N, D+2, Pp)
    d2 = D + 2
    feat_a = jnp.pad(feat_a, ((0, 0), (0, DP - d2), (0, 0)))     # zero rows: no effect
    feat_b = jnp.pad(feat_b, ((0, 0), (0, DP - d2), (0, 0)))
    feat_a = feat_a.transpose(0, 2, 1)                           # (N, Pp, 128) lane-dense LHS
    # feat_b stays (N, 128, Pp): lane-dense RHS.

    unary_cp = unary.reshape(N, C, P)                            # (N, C, P)
    if Pp != P:
        unary_cp = jnp.pad(unary_cp, ((0, 0), (0, 0), (0, Pp - P)),
                           constant_values=1.0)

    # Spatial operator: cached host-side per (H, W, sxy), pre-scaled by
    # compat_spatial (jit constant, no per-call O(P^2) XLA work, no leaks).
    s_mat = jnp.asarray(_spatial_matrix_np(H, W, float(sxy_spatial)))
    s_mat = s_mat * jnp.float32(compat_spatial)
    if Pp != P:
        s_mat = jnp.pad(s_mat, ((0, Pp - P), (0, Pp - P)))       # padded pixels: no messages

    col_tile = 512 if Pp % 512 == 0 else (256 if Pp % 256 == 0 else 128)
    col_tile = min(col_tile, Pp)

    kernel = functools.partial(
        _crf_kernel, num_iter=int(num_iter), bf_scale=bf_scale,
        normalize_final_iter=bool(normalize_final_iter), col_tile=col_tile)

    cost = pl.CostEstimate(
        flops=int(N * (2 * DP * Pp * Pp + num_iter * 2 * C * Pp * Pp)),
        transcendentals=int(N * (Pp * Pp + num_iter * 2 * C * Pp)),
        bytes_accessed=int((feat_a.size + feat_b.size + unary_cp.size
                            + s_mat.size + N * C * Pp) * 4))

    out = pl.pallas_call(
        kernel,
        out_shape=jax.ShapeDtypeStruct((N, C, Pp), jnp.float32),
        grid_spec=pltpu.PrefetchScalarGridSpec(
            num_scalar_prefetch=0,
            grid=(N,),
            in_specs=[
                pl.BlockSpec((1, Pp, DP), lambda n: (n, 0, 0)),
                pl.BlockSpec((1, DP, Pp), lambda n: (n, 0, 0)),
                pl.BlockSpec((1, C, Pp), lambda n: (n, 0, 0)),
                # S never changes across the batch grid: whole-array VMEM
                # residence -> one buffer, one DMA (no 2x double buffering).
                pl.BlockSpec(memory_space=pltpu.MemorySpace.VMEM),
            ],
            out_specs=pl.BlockSpec((1, C, Pp), lambda n: (n, 0, 0)),
            scratch_shapes=[pltpu.VMEM((Pp, Pp), jnp.float32)],   # fused operator M
        ),
        compiler_params=pltpu.CompilerParams(
            dimension_semantics=("parallel",),
            vmem_limit_bytes=_vmem_limit_bytes(Pp, DP, C, col_tile)),
        cost_estimate=cost,
    )(feat_a, feat_b, unary_cp, s_mat)
    # TODO(synk): for N == 1 on v7x (2 TensorCores) add a second parallel grid
    # axis over P-column blocks of M so both cores stay busy; for H*W >~ 1.5k
    # on v7x (64 MiB VMEM) the (P, P) operator must be column-tiled onto that
    # grid axis instead of living whole in a VMEM scratch.

    return out[:, :, :P].reshape(N, C, H, W)


def _crf_reference(unary, ref, *, sxy_bf=70.0, sc_bf=12.0, compat_bf=4.0,
                   sxy_spatial=6.0, compat_spatial=2.0, num_iter=5,
                   normalize_final_iter=True):
    """Pure-JAX f32 reference with the same dense-Gaussian-filter semantics."""
    unary = unary.astype(jnp.float32)
    N, C, H, W = unary.shape
    P = H * W
    y = jnp.broadcast_to(jnp.arange(H, dtype=jnp.float32)[:, None], (H, W))
    x = jnp.broadcast_to(jnp.arange(W, dtype=jnp.float32)[None, :], (H, W))
    grid = jnp.broadcast_to(jnp.stack([y, x], axis=0)[None], (N, 2, H, W))
    stacked = jnp.concatenate([grid, ref.astype(jnp.float32)], axis=1)
    kstd = jnp.array([sxy_bf, sxy_bf] + [sc_bf] * ref.shape[1], jnp.float32)
    feat = (stacked / kstd[None, :, None, None]).reshape(N, -1, P)
    diff = feat[:, :, :, None] - feat[:, :, None, :]                 # (N, D, P, P)
    bmat = jnp.exp(-0.5 * jnp.sum(diff * diff, axis=1))              # (N, P, P)
    smat = jnp.asarray(_spatial_matrix_np(H, W, float(sxy_spatial)))
    u = jnp.log(jnp.clip(unary.reshape(N, C, P), 1e-5, 1.0))
    hi = jax.lax.Precision.HIGHEST
    q = jax.nn.softmax(u, axis=1)
    for i in range(num_iter):
        qbf = jnp.einsum("ncp,npq->ncq", q, bmat, precision=hi)      # B symmetric
        qsf = jnp.einsum("ncp,pq->ncq", q, smat, precision=hi)       # S symmetric
        q_hat = u + compat_bf * qbf + compat_spatial * qsf
        if normalize_final_iter or i < num_iter - 1:
            q = jax.nn.softmax(q_hat, axis=1)
        else:
            q = q_hat
    return q.reshape(N, C, H, W)


if __name__ == "__main__":
    key = jax.random.PRNGKey(0)
    N, n_ref, n_out, H, W = 2, 3, 4, 16, 16
    k1, k2 = jax.random.split(key)
    # unary: pseudo-probabilities in (0, 1]; ref: image-like values in [0, 255]
    unary = jax.random.uniform(k1, (N, n_out, H, W), jnp.float32, 1e-4, 1.0)
    ref = jax.random.uniform(k2, (N, n_ref, H, W), jnp.float32, 0.0, 255.0)

    out = crf_forward(unary, ref)
    out = jax.block_until_ready(out)

    assert out.shape == (N, n_out, H, W), out.shape
    assert bool(jnp.all(jnp.isfinite(out)))
    # normalize_final_iter=True -> label probabilities sum to 1 per pixel
    assert bool(jnp.allclose(jnp.sum(out, axis=1), 1.0, atol=1e-3))
    # Compare against the pure-JAX f32 reference.
    expected = _crf_reference(unary, ref)
    max_err = float(jnp.max(jnp.abs(out - expected)))
    assert max_err < 5e-2, max_err
    print("KERNEL_OK")
</pallas_src>

<mosaic_0001>
module attributes {stable_mosaic.version = 11 : i64} {
  func.func @_crf_kernel(%arg0: i32, %arg1: memref<1x256x128xf32, #tpu.memory_space<vmem>>, %arg2: memref<1x128x256xf32, #tpu.memory_space<vmem>>, %arg3: memref<1x4x256xf32, #tpu.memory_space<vmem>>, %arg4: memref<256x256xf32, #tpu.memory_space<vmem>>, %arg5: memref<1x4x256xf32, #tpu.memory_space<vmem>>, %arg6: memref<256x256xf32, #tpu.memory_space<vmem>>) attributes {dimension_semantics = [#tpu.dimension_semantics<parallel>], iteration_bounds = array<i64: 2>, scalar_prefetch = 0 : i64, scratch_operands = 1 : i64, tpu.core_type = #tpu.core_type<tc>, window_params = [{transform_indices = @transform_0, window_bounds = array<i64: 1, 256, 128>}, {transform_indices = @transform_1, window_bounds = array<i64: 1, 128, 256>}, {transform_indices = @transform_2, window_bounds = array<i64: 1, 4, 256>}, {pipeline_mode = #tpu.pipeline_mode<synchronous>, transform_indices = @transform_3, window_bounds = array<i64: 256, 256>}, {transform_indices = @transform_4, window_bounds = array<i64: 1, 4, 256>}]} {
    %c0 = arith.constant 0 : index
    %c0_0 = arith.constant 0 : index
    %c0_1 = arith.constant 0 : index
    %0 = vector.load %arg1[%c0, %c0_0, %c0_1] : memref<1x256x128xf32, #tpu.memory_space<vmem>>, vector<1x256x128xf32>
    %1 = vector.shape_cast %0 : vector<1x256x128xf32> to vector<256x128xf32>
    %c0_2 = arith.constant 0 : index
    %c0_3 = arith.constant 0 : index
    %c0_4 = arith.constant 0 : index
    %2 = vector.load %arg2[%c0_2, %c0_3, %c0_4] : memref<1x128x256xf32, #tpu.memory_space<vmem>>, vector<1x128x256xf32>
    %3 = vector.shape_cast %2 : vector<1x128x256xf32> to vector<128x256xf32>
    %cst = arith.constant dense<0.000000e+00> : vector<256x256xf32>
    %4 = tpu.matmul %1, %3, %cst {dimension_numbers = #tpu.dot_dimension_numbers<[1], [0], [0], [1], [0, 0, 1, 1], [], []>} : vector<256x128xf32>, vector<128x256xf32>, vector<256x256xf32> -> vector<256x256xf32>
    %5 = math.exp %4 : vector<256x256xf32>
    %c0_5 = arith.constant 0 : index
    %c0_6 = arith.constant 0 : index
    %6 = vector.load %arg4[%c0_5, %c0_6] : memref<256x256xf32, #tpu.memory_space<vmem>>, vector<256x256xf32>
    %7 = arith.addf %5, %6 : vector<256x256xf32>
    %c0_7 = arith.constant 0 : index
    %c0_8 = arith.constant 0 : index
    %8 = vector.load %arg6[%c0_7, %c0_8] : memref<256x256xf32, #tpu.memory_space<vmem>>, vector<256x256xf32>
    tpu.vector_store %arg6[%c0_7, %c0_8], %7 {strides = array<i32>} : memref<256x256xf32, #tpu.memory_space<vmem>>, vector<256x256xf32>,
    %c0_9 = arith.constant 0 : index
    %c0_10 = arith.constant 0 : index
    %c0_11 = arith.constant 0 : index
    %9 = vector.load %arg3[%c0_9, %c0_10, %c0_11] : memref<1x4x256xf32, #tpu.memory_space<vmem>>, vector<1x4x256xf32>
    %10 = vector.shape_cast %9 : vector<1x4x256xf32> to vector<4x256xf32>
    %cst_12 = arith.constant 9.99999974E-6 : f32
    %cst_13 = arith.constant 1.000000e+00 : f32
    %11 = vector.broadcast %cst_12 : f32 to vector<4x256xf32>
    %12 = arith.maximumf %11, %10 : vector<4x256xf32>
    %13 = vector.broadcast %cst_13 : f32 to vector<4x256xf32>
    %14 = arith.minimumf %13, %12 : vector<4x256xf32>
    %15 = math.log %14 : vector<4x256xf32>
    %cst_14 = arith.constant dense<0xFF800000> : vector<256xf32>
    %16 = vector.multi_reduction <maximumf>, %15, %cst_14 [0] : vector<4x256xf32> to vector<256xf32>
    %17 = vector.shape_cast %16 : vector<256xf32> to vector<1x256xf32>
    %18 = vector.broadcast %17 : vector<1x256xf32> to vector<4x256xf32>
    %19 = arith.subf %15, %18 : vector<4x256xf32>
    %20 = math.exp %19 : vector<4x256xf32>
    %cst_15 = arith.constant dense<0.000000e+00> : vector<256xf32>
    %21 = vector.multi_reduction <add>, %20, %cst_15 [0] : vector<4x256xf32> to vector<256xf32>
    %22 = vector.shape_cast %21 : vector<256xf32> to vector<1x256xf32>
    %23 = vector.broadcast %22 : vector<1x256xf32> to vector<4x256xf32>
    %24 = arith.divf %20, %23 : vector<4x256xf32>
    %c0_16 = arith.constant 0 : index
    %c0_17 = arith.constant 0 : index
    %25 = vector.load %arg6[%c0_16, %c0_17] : memref<256x256xf32, #tpu.memory_space<vmem>>, vector<256x256xf32>
    %cst_18 = arith.constant dense<0.000000e+00> : vector<4x256xf32>
    %26 = tpu.matmul %24, %25, %cst_18 {dimension_numbers = #tpu.dot_dimension_numbers<[1], [0], [0], [1], [0, 0, 1, 1], [], []>} : vector<4x256xf32>, vector<256x256xf32>, vector<4x256xf32> -> vector<4x256xf32>
    %27 = arith.addf %15, %26 : vector<4x256xf32>
    %cst_19 = arith.constant dense<0xFF800000> : vector<256xf32>
    %28 = vector.multi_reduction <maximumf>, %27, %cst_19 [0] : vector<4x256xf32> to vector<256xf32>
    %29 = vector.shape_cast %28 : vector<256xf32> to vector<1x256xf32>
    %30 = vector.broadcast %29 : vector<1x256xf32> to vector<4x256xf32>
    %31 = arith.subf %27, %30 : vector<4x256xf32>
    %32 = math.exp %31 : vector<4x256xf32>
    %cst_20 = arith.constant dense<0.000000e+00> : vector<256xf32>
    %33 = vector.multi_reduction <add>, %32, %cst_20 [0] : vector<4x256xf32> to vector<256xf32>
    %34 = vector.shape_cast %33 : vector<256xf32> to vector<1x256xf32>
    %35 = vector.broadcast %34 : vector<1x256xf32> to vector<4x256xf32>
    %36 = arith.divf %32, %35 : vector<4x256xf32>
    %c0_21 = arith.constant 0 : index
    %c0_22 = arith.constant 0 : index
    %37 = vector.load %arg6[%c0_21, %c0_22] : memref<256x256xf32, #tpu.memory_space<vmem>>, vector<256x256xf32>
    %cst_23 = arith.constant dense<0.000000e+00> : vector<4x256xf32>
    %38 = tpu.matmul %36, %37, %cst_23 {dimension_numbers = #tpu.dot_dimension_numbers<[1], [0], [0], [1], [0, 0, 1, 1], [], []>} : vector<4x256xf32>, vector<256x256xf32>, vector<4x256xf32> -> vector<4x256xf32>
    %39 = arith.addf %15, %38 : vector<4x256xf32>
    %cst_24 = arith.constant dense<0xFF800000> : vector<256xf32>
    %40 = vector.multi_reduction <maximumf>, %39, %cst_24 [0] : vector<4x256xf32> to vector<256xf32>
    %41 = vector.shape_cast %40 : vector<256xf32> to vector<1x256xf32>
    %42 = vector.broadcast %41 : vector<1x256xf32> to vector<4x256xf32>
    %43 = arith.subf %39, %42 : vector<4x256xf32>
    %44 = math.exp %43 : vector<4x256xf32>
    %cst_25 = arith.constant dense<0.000000e+00> : vector<256xf32>
    %45 = vector.multi_reduction <add>, %44, %cst_25 [0] : vector<4x256xf32> to vector<256xf32>
    %46 = vector.shape_cast %45 : vector<256xf32> to vector<1x256xf32>
    %47 = vector.broadcast %46 : vector<1x256xf32> to vector<4x256xf32>
    %48 = arith.divf %44, %47 : vector<4x256xf32>
    %c0_26 = arith.constant 0 : index
    %c0_27 = arith.constant 0 : index
    %49 = vector.load %arg6[%c0_26, %c0_27] : memref<256x256xf32, #tpu.memory_space<vmem>>, vector<256x256xf32>
    %cst_28 = arith.constant dense<0.000000e+00> : vector<4x256xf32>
    %50 = tpu.matmul %48, %49, %cst_28 {dimension_numbers = #tpu.dot_dimension_numbers<[1], [0], [0], [1], [0, 0, 1, 1], [], []>} : vector<4x256xf32>, vector<256x256xf32>, vector<4x256xf32> -> vector<4x256xf32>
    %51 = arith.addf %15, %50 : vector<4x256xf32>
    %cst_29 = arith.constant dense<0xFF800000> : vector<256xf32>
    %52 = vector.multi_reduction <maximumf>, %51, %cst_29 [0] : vector<4x256xf32> to vector<256xf32>
    %53 = vector.shape_cast %52 : vector<256xf32> to vector<1x256xf32>
    %54 = vector.broadcast %53 : vector<1x256xf32> to vector<4x256xf32>
    %55 = arith.subf %51, %54 : vector<4x256xf32>
    %56 = math.exp %55 : vector<4x256xf32>
    %cst_30 = arith.constant dense<0.000000e+00> : vector<256xf32>
    %57 = vector.multi_reduction <add>, %56, %cst_30 [0] : vector<4x256xf32> to vector<256xf32>
    %58 = vector.shape_cast %57 : vector<256xf32> to vector<1x256xf32>
    %59 = vector.broadcast %58 : vector<1x256xf32> to vector<4x256xf32>
    %60 = arith.divf %56, %59 : vector<4x256xf32>
    %c0_31 = arith.constant 0 : index
    %c0_32 = arith.constant 0 : index
    %61 = vector.load %arg6[%c0_31, %c0_32] : memref<256x256xf32, #tpu.memory_space<vmem>>, vector<256x256xf32>
    %cst_33 = arith.constant dense<0.000000e+00> : vector<4x256xf32>
    %62 = tpu.matmul %60, %61, %cst_33 {dimension_numbers = #tpu.dot_dimension_numbers<[1], [0], [0], [1], [0, 0, 1, 1], [], []>} : vector<4x256xf32>, vector<256x256xf32>, vector<4x256xf32> -> vector<4x256xf32>
    %63 = arith.addf %15, %62 : vector<4x256xf32>
    %cst_34 = arith.constant dense<0xFF800000> : vector<256xf32>
    %64 = vector.multi_reduction <maximumf>, %63, %cst_34 [0] : vector<4x256xf32> to vector<256xf32>
    %65 = vector.shape_cast %64 : vector<256xf32> to vector<1x256xf32>
    %66 = vector.broadcast %65 : vector<1x256xf32> to vector<4x256xf32>
    %67 = arith.subf %63, %66 : vector<4x256xf32>
    %68 = math.exp %67 : vector<4x256xf32>
    %cst_35 = arith.constant dense<0.000000e+00> : vector<256xf32>
    %69 = vector.multi_reduction <add>, %68, %cst_35 [0] : vector<4x256xf32> to vector<256xf32>
    %70 = vector.shape_cast %69 : vector<256xf32> to vector<1x256xf32>
    %71 = vector.broadcast %70 : vector<1x256xf32> to vector<4x256xf32>
    %72 = arith.divf %68, %71 : vector<4x256xf32>
    %c0_36 = arith.constant 0 : index
    %c0_37 = arith.constant 0 : index
    %73 = vector.load %arg6[%c0_36, %c0_37] : memref<256x256xf32, #tpu.memory_space<vmem>>, vector<256x256xf32>
    %cst_38 = arith.constant dense<0.000000e+00> : vector<4x256xf32>
    %74 = tpu.matmul %72, %73, %cst_38 {dimension_numbers = #tpu.dot_dimension_numbers<[1], [0], [0], [1], [0, 0, 1, 1], [], []>} : vector<4x256xf32>, vector<256x256xf32>, vector<4x256xf32> -> vector<4x256xf32>
    %75 = arith.addf %15, %74 : vector<4x256xf32>
    %cst_39 = arith.constant dense<0xFF800000> : vector<256xf32>
    %76 = vector.multi_reduction <maximumf>, %75, %cst_39 [0] : vector<4x256xf32> to vector<256xf32>
    %77 = vector.shape_cast %76 : vector<256xf32> to vector<1x256xf32>
    %78 = vector.broadcast %77 : vector<1x256xf32> to vector<4x256xf32>
    %79 = arith.subf %75, %78 : vector<4x256xf32>
    %80 = math.exp %79 : vector<4x256xf32>
    %cst_40 = arith.constant dense<0.000000e+00> : vector<256xf32>
    %81 = vector.multi_reduction <add>, %80, %cst_40 [0] : vector<4x256xf32> to vector<256xf32>
    %82 = vector.shape_cast %81 : vector<256xf32> to vector<1x256xf32>
    %83 = vector.broadcast %82 : vector<1x256xf32> to vector<4x256xf32>
    %84 = arith.divf %80, %83 : vector<4x256xf32>
    %c0_41 = arith.constant 0 : index
    %c0_42 = arith.constant 0 : index
    %c0_43 = arith.constant 0 : index
    %85 = vector.load %arg5[%c0_41, %c0_42, %c0_43] : memref<1x4x256xf32, #tpu.memory_space<vmem>>, vector<1x4x256xf32>
    %86 = vector.shape_cast %85 : vector<1x4x256xf32> to vector<4x256xf32>
    %87 = vector.shape_cast %84 : vector<4x256xf32> to vector<1x4x256xf32>
    tpu.vector_store %arg5[%c0_41, %c0_42, %c0_43], %87 {strides = array<i32>} : memref<1x4x256xf32, #tpu.memory_space<vmem>>, vector<1x4x256xf32>,
    return
  }
  func.func @transform_0(%arg0: i32) -> (i32, i32, i32) {
    %c0_i32 = arith.constant 0 : i32
    %c0_i32_0 = arith.constant 0 : i32
    %c0_i32_1 = arith.constant 0 : i32
    return %arg0, %c0_i32, %c0_i32_0 : i32, i32, i32
  }
  func.func @transform_1(%arg0: i32) -> (i32, i32, i32) {
    %c0_i32 = arith.constant 0 : i32
    %c0_i32_0 = arith.constant 0 : i32
    %c0_i32_1 = arith.constant 0 : i32
    return %arg0, %c0_i32, %c0_i32_0 : i32, i32, i32
  }
  func.func @transform_2(%arg0: i32) -> (i32, i32, i32) {
    %c0_i32 = arith.constant 0 : i32
    %c0_i32_0 = arith.constant 0 : i32
    %c0_i32_1 = arith.constant 0 : i32
    return %arg0, %c0_i32, %c0_i32_0 : i32, i32, i32
  }
  func.func @transform_3(%arg0: i32) -> (i32, i32) {
    %c0_i32 = arith.constant 0 : i32
    %c0_i32_0 = arith.constant 0 : i32
    %c0_i32_1 = arith.constant 0 : i32
    return %c0_i32, %c0_i32_0 : i32, i32
  }
  func.func @transform_4(%arg0: i32) -> (i32, i32, i32) {
    %c0_i32 = arith.constant 0 : i32
    %c0_i32_0 = arith.constant 0 : i32
    %c0_i32_1 = arith.constant 0 : i32
    return %arg0, %c0_i32, %c0_i32_0 : i32, i32, i32
  }
}

</mosaic_0001>

<llo_original>
// kernel: crf_forward.1
$region0: #{crf_forward.1}
  #allocation0 [shape = 'u32[]', space=smem, size = 0x4, offset = 0x4, fixed_abs, tag = 'smem constant byte address 0x4 - core index']
  #allocation1 [shape = 'u32[144,128]{1,0:T(1,128)}', space=vmem, size = 0x12000, scoped, tag = 'internal scratch']
  #allocation2 [shape = 'f32[256,256]{1,0:T(8,128)}', space=vmem, size = 0x40000, scoped, tag = 'scratch operand']
  %s0 = inlined_call_operand.vmem [shape: f32[2,256,128], index: 0, kind: input, shape index: {}]
  %s1 = inlined_call_operand.vmem [shape: f32[2,128,256], index: 1, kind: input, shape index: {}]
  %s2 = inlined_call_operand.vmem [shape: f32[2,4,256], index: 2, kind: input, shape index: {}]
  %s3 = inlined_call_operand.vmem [shape: f32[256,256], index: 3, kind: input, shape index: {}]
  %s4 = inlined_call_operand.vmem [shape: f32[2,4,256], index: 4, kind: output, shape index: {}]
  %s5 = sld [smem:[#allocation0]]
  $region49: #{crf_forward.1} parent=0
    _
  %s7 = ssub.s32 1, %s5
  %s8 = scalar_select 0, %s7, %s5
  loop: start=0, step=1, limit=4
  $region2: #{crf_forward.1} parent=0 // loop_pre_header
    _
  $region3: #{crf_forward.1} parent=0 // loop_header
    %s10 = sphi 0, %s14
    %p11 = scmp.ge.s32.totalorder %s10, 4
    %s20 = sphi 0, %s22
    %s23 = sphi 0, %s20
    %s24 = sphi 0, %s23
    %s40 = sphi 0, %s24
    %s46 = sphi 0, %s48
    %s49 = sphi 0, %s46
    %s50 = sphi 0, %s49
    %s66 = sphi 0, %s50
    %s72 = sphi 0, %s74
    %s75 = sphi 0, %s72
    %s76 = sphi 0, %s75
    %s92 = sphi 0, %s76
    %s96 = sphi 0, %s96
    %s98 = sphi 0, %s96
    %s99 = sphi 0, %s98
    %s113 = sphi 0, %s99
    %s119 = sphi 0, %s121
    %s122 = sphi 0, %s119
    %s123 = sphi 0, %s122
    %s139 = sphi 0, %s123
  $region4: #{crf_forward.1} parent=0 // loop_header_branch
    %13 = sbr.rel (%p11) target = $region8
  $region5: #{crf_forward.1} parent=0 // loop_body
    %s15 = ssub.s32 %s10, 1
    %s16 = ssub.s32 %s10, 2
    %s17 = sadd.s32 %s10, 1
    %s18 = ssub.s32 %s10, %s17
    %p19 = scmp.eq.s32.totalorder %s18, 0
    %s21 = sadd.s32 %s20, 1
    %s22 = scalar_select %p19, %s20, %s21
    %p25 = pneg %p19
    %p26 = scmp.eq.s32.totalorder %s10, 1
    %p27 = por %p25, %p26
    %p28 = scmp.ne.s32.totalorder %s20, %s23
    %p29 = scmp.eq.s32.totalorder %s10, 0
    %p30 = por %p28, %p29
    %p31 = scmp.ne.s32.totalorder %s20, %s23
    %p32 = scmp.eq.s32.totalorder %s15, 1
    %p33 = por %p31, %p32
    %p34 = scmp.ne.s32.totalorder %s23, %s24
    %p35 = scmp.eq.s32.totalorder %s15, 0
    %p36 = por %p34, %p35
    %p37 = scmp.ne.s32.totalorder %s23, %s24
    %p38 = scmp.eq.s32.totalorder %s16, 1
    %p39 = por %p37, %p38
    %p41 = scmp.ne.s32.totalorder %s24, %s40
    %p42 = scmp.eq.s32.totalorder %s16, 0
    %p43 = por %p41, %p42
    %s44 = ssub.s32 %s10, %s17
    %p45 = scmp.eq.s32.totalorder %s44, 0
    %s47 = sadd.s32 %s46, 1
    %s48 = scalar_select %p45, %s46, %s47
    %p51 = pneg %p45
    %p52 = scmp.eq.s32.totalorder %s10, 1
    %p53 = por %p51, %p52
    %p54 = scmp.ne.s32.totalorder %s46, %s49
    %p55 = scmp.eq.s32.totalorder %s10, 0
    %p56 = por %p54, %p55
    %p57 = scmp.ne.s32.totalorder %s46, %s49
    %p58 = scmp.eq.s32.totalorder %s15, 1
    %p59 = por %p57, %p58
    %p60 = scmp.ne.s32.totalorder %s49, %s50
    %p61 = scmp.eq.s32.totalorder %s15, 0
    %p62 = por %p60, %p61
    %p63 = scmp.ne.s32.totalorder %s49, %s50
    %p64 = scmp.eq.s32.totalorder %s16, 1
    %p65 = por %p63, %p64
    %p67 = scmp.ne.s32.totalorder %s50, %s66
    %p68 = scmp.eq.s32.totalorder %s16, 0
    %p69 = por %p67, %p68
    %s70 = ssub.s32 %s10, %s17
    %p71 = scmp.eq.s32.totalorder %s70, 0
    %s73 = sadd.s32 %s72, 1
    %s74 = scalar_select %p71, %s72, %s73
    %p77 = pneg %p71
    %p78 = scmp.eq.s32.totalorder %s10, 1
    %p79 = por %p77, %p78
    %p80 = scmp.ne.s32.totalorder %s72, %s75
    %p81 = scmp.eq.s32.totalorder %s10, 0
    %p82 = por %p80, %p81
    %p83 = scmp.ne.s32.totalorder %s72, %s75
    %p84 = scmp.eq.s32.totalorder %s15, 1
    %p85 = por %p83, %p84
    %p86 = scmp.ne.s32.totalorder %s75, %s76
    %p87 = scmp.eq.s32.totalorder %s15, 0
    %p88 = por %p86, %p87
    %p89 = scmp.ne.s32.totalorder %s75, %s76
    %p90 = scmp.eq.s32.totalorder %s16, 1
    %p91 = por %p89, %p90
    %p93 = scmp.ne.s32.totalorder %s76, %s92
    %p94 = scmp.eq.s32.totalorder %s16, 0
    %p95 = por %p93, %p94
    %s97 = sadd.s32 %s96, 1
    %p100 = scmp.eq.s32.totalorder %s10, 1
    %p101 = scmp.ne.s32.totalorder %s96, %s98
    %p102 = scmp.eq.s32.totalorder %s10, 0
    %p103 = por %p101, %p102
    %p104 = scmp.ne.s32.totalorder %s96, %s98
    %p105 = scmp.eq.s32.totalorder %s15, 1
    %p106 = por %p104, %p105
    %p107 = scmp.ne.s32.totalorder %s98, %s99
    %p108 = scmp.eq.s32.totalorder %s15, 0
    %p109 = por %p107, %p108
    %p110 = scmp.ne.s32.totalorder %s98, %s99
    %p111 = scmp.eq.s32.totalorder %s16, 1
    %p112 = por %p110, %p111
    %p114 = scmp.ne.s32.totalorder %s99, %s113
    %p115 = scmp.eq.s32.totalorder %s16, 0
    %p116 = por %p114, %p115
    %s117 = ssub.s32 %s10, %s17
    %p118 = scmp.eq.s32.totalorder %s117, 0
    %s120 = sadd.s32 %s119, 1
    %s121 = scalar_select %p118, %s119, %s120
    %p124 = pneg %p118
    %p125 = scmp.eq.s32.totalorder %s10, 1
    %p126 = por %p124, %p125
    %p127 = scmp.ne.s32.totalorder %s119, %s122
    %p128 = scmp.eq.s32.totalorder %s10, 0
    %p129 = por %p127, %p128
    %p130 = scmp.ne.s32.totalorder %s119, %s122
    %p131 = scmp.eq.s32.totalorder %s15, 1
    %p132 = por %p130, %p131
    %p133 = scmp.ne.s32.totalorder %s122, %s123
    %p134 = scmp.eq.s32.totalorder %s15, 0
    %p135 = por %p133, %p134
    %p136 = scmp.ne.s32.totalorder %s122, %s123
    %p137 = scmp.eq.s32.totalorder %s16, 1
    %p138 = por %p136, %p137
    %p140 = scmp.ne.s32.totalorder %s123, %s139
    %p141 = scmp.eq.s32.totalorder %s16, 0
    %p142 = por %p140, %p141
    %p143 = scmp.le.s32.totalorder 1, %s10
    %p144 = scmp.lt.s32.totalorder %s10, 3
    %p145 = pnand %p143, %p144
    %p146 = pneg %p145
    // Predicated region
    $region9: #{crf_forward.1} parent=5 // pred_check
      _
    $region10: #{crf_forward.1} parent=5 // pred_check_branch
      %148 = sbr.rel (%p145) target = $region12
    $region11: #{crf_forward.1} parent=5 // pred_region
      %s149 = ssub.s32 %s10, 1
      // Predicated region
      $region13: #{crf_forward.1} parent=11 // pred_check
        %p150 = pneg %p109
      $region14: #{crf_forward.1} parent=11 // pred_check_branch
        %152 = sbr.rel (%p150) target = $region16
      $region15: #{crf_forward.1} parent=11 // pred_region
        _
      $region16: #{crf_forward.1} parent=11 // pred_fallthru
        _
    $region12: #{crf_forward.1} parent=5 // pred_fallthru
      _
    %p153 = scmp.lt.s32.totalorder %s10, 2
    // Predicated region
    $region17: #{crf_forward.1} parent=5 // pred_check
      %p154 = pneg %p153
    $region18: #{crf_forward.1} parent=5 // pred_check_branch
      %156 = sbr.rel (%p154) target = $region20
    $region19: #{crf_forward.1} parent=5 // pred_region
      // Predicated region
      $region21: #{crf_forward.1} parent=19 // pred_check
        %p157 = pneg %p30
      $region22: #{crf_forward.1} parent=19 // pred_check_branch
        %159 = sbr.rel (%p157) target = $region24
      $region23: #{crf_forward.1} parent=19 // pred_region
        %p160 = scmp.lt.s32.totalorder %s10, 1
        %s161 = scalar_select %p160, %s10, 1
        %s162 = smul.addr %s161, 32
        %s163 = smul.addr %s162, 8
        %s164 = scalar_lea.vmem %s0, %s163
      $region24: #{crf_forward.1} parent=19 // pred_fallthru
        _
      // Predicated region
      $region25: #{crf_forward.1} parent=19 // pred_check
        %p165 = pneg %p56
      $region26: #{crf_forward.1} parent=19 // pred_check_branch
        %167 = sbr.rel (%p165) target = $region28
      $region27: #{crf_forward.1} parent=19 // pred_region
        %p168 = scmp.lt.s32.totalorder %s10, 1
        %s169 = scalar_select %p168, %s10, 1
        %s170 = smul.addr %s169, 32
        %s171 = smul.addr %s170, 8
        %s172 = scalar_lea.vmem %s1, %s171
      $region28: #{crf_forward.1} parent=19 // pred_fallthru
        _
      // Predicated region
      $region29: #{crf_forward.1} parent=19 // pred_check
        %p173 = pneg %p82
      $region30: #{crf_forward.1} parent=19 // pred_check_branch
        %175 = sbr.rel (%p173) target = $region32
      $region31: #{crf_forward.1} parent=19 // pred_region
        %p176 = scmp.lt.s32.totalorder %s10, 1
        %s177 = scalar_select %p176, %s10, 1
        %s178 = smul.addr %s177, 2
        %s179 = smul.addr %s178, 4
        %s180 = scalar_lea.vmem %s2, %s179
      $region32: #{crf_forward.1} parent=19 // pred_fallthru
        _
    $region20: #{crf_forward.1} parent=5 // pred_fallthru
      _
    %p181 = scmp.le.s32.totalorder 1, %s10
    %p182 = scmp.lt.s32.totalorder %s10, 3
    %p183 = pnand %p181, %p182
    %p184 = pneg %p183
    // Predicated region
    $region33: #{crf_forward.1} parent=5 // pred_check
      _
    $region34: #{crf_forward.1} parent=5 // pred_check_branch
      %186 = sbr.rel (%p183) target = $region36
    $region35: #{crf_forward.1} parent=5 // pred_region
      %s187 = ssub.s32 %s10, 1
      %p188 = scmp.lt.s32.totalorder %s15, 1
      %s189 = scalar_select %p188, %s15, 1
      %s190 = smul.addr %s189, 32
      %s191 = smul.addr %s190, 8
      %s192 = scalar_lea.vmem %s0, %s191
      %p193 = pneg %p36
      %p194 = pneg %p33
      %p195 = scmp.lt.s32.totalorder %s15, 1
      %s196 = scalar_select %p195, %s15, 1
      %s197 = smul.addr %s196, 32
      %s198 = smul.addr %s197, 8
      %s199 = scalar_lea.vmem %s1, %s198
      %p200 = pneg %p62
      %p201 = pneg %p59
      %p202 = scmp.lt.s32.totalorder %s15, 1
      %s203 = scalar_select %p202, %s15, 1
      %s204 = smul.addr %s203, 2
      %s205 = smul.addr %s204, 4
      %s206 = scalar_lea.vmem %s2, %s205
      %p207 = pneg %p88
      %p208 = pneg %p85
      %p209 = pneg %p109
      %p210 = pneg %p106
      %p211 = pneg %p135
      %p212 = pneg %p132
      %p213 = scmp.lt.s32.totalorder %s15, 1
      %s214 = scalar_select %p213, %s15, 1
      %s215 = smul.addr %s214, 2
      %s216 = smul.addr %s215, 4
      %s217 = scalar_lea.vmem %s4, %s216
      %p218 = scmp.lt.s32.totalorder %s15, 1
      %s219 = scalar_select %p218, %s15, 1
      %s220 = smul.addr %s219, 32
      %s221 = smul.addr %s220, 8
      %s222 = scalar_lea.vmem %s0, %s221
      %p223 = scmp.lt.s32.totalorder %s15, 1
      %s224 = scalar_select %p223, %s15, 1
      %s225 = smul.addr %s224, 32
      %s226 = smul.addr %s225, 8
      %s227 = scalar_lea.vmem %s1, %s226
      %p228 = scmp.lt.s32.totalorder %s15, 1
      %s229 = scalar_select %p228, %s15, 1
      %s230 = smul.addr %s229, 2
      %s231 = smul.addr %s230, 4
      %s232 = scalar_lea.vmem %s2, %s231
      %p233 = scmp.lt.s32.totalorder %s15, 1
      %s234 = scalar_select %p233, %s15, 1
      %s235 = smul.addr %s234, 2
      %s236 = smul.addr %s235, 4
      %s237 = scalar_lea.vmem %s4, %s236
      %v238 = vld [vmem:[%s222] sm:$0xff]
      %v239 = vld [vmem:[%s222 + $0x8] sm:$0xff]
      %v240 = vld [vmem:[%s222 + $0x10] sm:$0xff]
      %v241 = vld [vmem:[%s222 + $0x18] sm:$0xff]
      %v242 = vld [vmem:[%s222 + $0x20] sm:$0xff]
      %v243 = vld [vmem:[%s222 + $0x28] sm:$0xff]
      %v244 = vld [vmem:[%s222 + $0x30] sm:$0xff]
      %v245 = vld [vmem:[%s222 + $0x38] sm:$0xff]
      %v246 = vld [vmem:[%s222 + $0x40] sm:$0xff]
      %v247 = vld [vmem:[%s222 + $0x48] sm:$0xff]
      %v248 = vld [vmem:[%s222 + $0x50] sm:$0xff]
      %v249 = vld [vmem:[%s222 + $0x58] sm:$0xff]
      %v250 = vld [vmem:[%s222 + $0x60] sm:$0xff]
      %v251 = vld [vmem:[%s222 + $0x68] sm:$0xff]
      %v252 = vld [vmem:[%s222 + $0x70] sm:$0xff]
      %v253 = vld [vmem:[%s222 + $0x78] sm:$0xff]
      %v254 = vld [vmem:[%s222 + $0x80] sm:$0xff]
      %v255 = vld [vmem:[%s222 + $0x88] sm:$0xff]
      %v256 = vld [vmem:[%s222 + $0x90] sm:$0xff]
      %v257 = vld [vmem:[%s222 + $0x98] sm:$0xff]
      %v258 = vld [vmem:[%s222 + $0xa0] sm:$0xff]
      %v259 = vld [vmem:[%s222 + $0xa8] sm:$0xff]
      %v260 = vld [vmem:[%s222 + $0xb0] sm:$0xff]
      %v261 = vld [vmem:[%s222 + $0xb8] sm:$0xff]
      %v262 = vld [vmem:[%s222 + $0xc0] sm:$0xff]
      %v263 = vld [vmem:[%s222 + $0xc8] sm:$0xff]
      %v264 = vld [vmem:[%s222 + $0xd0] sm:$0xff]
      %v265 = vld [vmem:[%s222 + $0xd8] sm:$0xff]
      %v266 = vld [vmem:[%s222 + $0xe0] sm:$0xff]
      %v267 = vld [vmem:[%s222 + $0xe8] sm:$0xff]
      %v268 = vld [vmem:[%s222 + $0xf0] sm:$0xff]
      %v269 = vld [vmem:[%s222 + $0xf8] sm:$0xff]
      %v270 = vld [vmem:[%s227] sm:$0xff]
      %v271 = vld [vmem:[%s227 + $0x8] sm:$0xff]
      %v272 = vld [vmem:[%s227 + $0x10] sm:$0xff]
      %v273 = vld [vmem:[%s227 + $0x18] sm:$0xff]
      %v274 = vld [vmem:[%s227 + $0x20] sm:$0xff]
      %v275 = vld [vmem:[%s227 + $0x28] sm:$0xff]
      %v276 = vld [vmem:[%s227 + $0x30] sm:$0xff]
      %v277 = vld [vmem:[%s227 + $0x38] sm:$0xff]
      %v278 = vld [vmem:[%s227 + $0x40] sm:$0xff]
      %v279 = vld [vmem:[%s227 + $0x48] sm:$0xff]
      %v280 = vld [vmem:[%s227 + $0x50] sm:$0xff]
      %v281 = vld [vmem:[%s227 + $0x58] sm:$0xff]
      %v282 = vld [vmem:[%s227 + $0x60] sm:$0xff]
      %v283 = vld [vmem:[%s227 + $0x68] sm:$0xff]
      %v284 = vld [vmem:[%s227 + $0x70] sm:$0xff]
      %v285 = vld [vmem:[%s227 + $0x78] sm:$0xff]
      %v286 = vld [vmem:[%s227 + $0x80] sm:$0xff]
      %v287 = vld [vmem:[%s227 + $0x88] sm:$0xff]
      %v288 = vld [vmem:[%s227 + $0x90] sm:$0xff]
      %v289 = vld [vmem:[%s227 + $0x98] sm:$0xff]
      %v290 = vld [vmem:[%s227 + $0xa0] sm:$0xff]
      %v291 = vld [vmem:[%s227 + $0xa8] sm:$0xff]
      %v292 = vld [vmem:[%s227 + $0xb0] sm:$0xff]
      %v293 = vld [vmem:[%s227 + $0xb8] sm:$0xff]
      %v294 = vld [vmem:[%s227 + $0xc0] sm:$0xff]
      %v295 = vld [vmem:[%s227 + $0xc8] sm:$0xff]
      %v296 = vld [vmem:[%s227 + $0xd0] sm:$0xff]
      %v297 = vld [vmem:[%s227 + $0xd8] sm:$0xff]
      %v298 = vld [vmem:[%s227 + $0xe0] sm:$0xff]
      %v299 = vld [vmem:[%s227 + $0xe8] sm:$0xff]
      %v300 = vld [vmem:[%s227 + $0xf0] sm:$0xff]
      %v301 = vld [vmem:[%s227 + $0xf8] sm:$0xff]
      %302 = vmatprep.subr.mxu0 %v301
      %303 = vmatpush1.msra.mxu0 %v300
      %304 = vmatprep.subr.mxu0 %v299
      %305 = vmatpush1.msra.mxu0 %v298
      %306 = vmatprep.subr.mxu0 %v297
      %307 = vmatpush1.msra.mxu0 %v296
      %308 = vmatprep.subr.mxu0 %v295
      %309 = vmatpush1.msra.mxu0 %v294
      %310 = vmatprep.subr.mxu0 %v293
      %311 = vmatpush1.msra.mxu0 %v292
      %312 = vmatprep.subr.mxu0 %v291
      %313 = vmatpush1.msra.mxu0 %v290
      %314 = vmatprep.subr.mxu0 %v289
      %315 = vmatpush1.msra.mxu0 %v288
      %316 = vmatprep.subr.mxu0 %v287
      %317 = vmatpush1.msra.mxu0 %v286
      %318 = vmatprep.subr.mxu0 %v285
      %319 = vmatpush1.msra.mxu0 %v284
      %320 = vmatprep.subr.mxu0 %v283
      %321 = vmatpush1.msra.mxu0 %v282
      %322 = vmatprep.subr.mxu0 %v281
      %323 = vmatpush1.msra.mxu0 %v280
      %324 = vmatprep.subr.mxu0 %v279
      %325 = vmatpush1.msra.mxu0 %v278
      %326 = vmatprep.subr.mxu0 %v277
      %327 = vmatpush1.msra.mxu0 %v276
      %328 = vmatprep.subr.mxu0 %v275
      %329 = vmatpush1.msra.mxu0 %v274
      %330 = vmatprep.subr.mxu0 %v273
      %331 = vmatpush1.msra.mxu0 %v272
      %332 = vmatprep.subr.mxu0 %v271
      %333 = vmatpush1.msra.mxu0 %v270
      %334 = vmatprep.subr.mxu0 0.0
      %335 = vmatpush2.msra.mxu0 0.0
      %336 = vmatprep.subr.mxu0 0.0
      %337 = vmatpush2.msra.mxu0 0.0
      %338 = vmatprep.subr.mxu0 0.0
      %339 = vmatpush2.msra.mxu0 0.0
      %340 = vmatprep.subr.mxu0 0.0
      %341 = vmatpush2.msra.mxu0 0.0
      %342 = vmatprep.subr.mxu0 0.0
      %343 = vmatpush2.msra.mxu0 0.0
      %344 = vmatprep.subr.mxu0 0.0
      %345 = vmatpush2.msra.mxu0 0.0
      %346 = vmatprep.subr.mxu0 0.0
      %347 = vmatpush2.msra.mxu0 0.0
      %348 = vmatprep.subr.mxu0 0.0
      %349 = vmatpush2.msra.mxu0 0.0
      %350 = vmatprep.subr.mxu0 0.0
      %351 = vmatpush2.msra.mxu0 0.0
      %352 = vmatprep.subr.mxu0 0.0
      %353 = vmatpush2.msra.mxu0 0.0
      %354 = vmatprep.subr.mxu0 0.0
      %355 = vmatpush2.msra.mxu0 0.0
      %356 = vmatprep.subr.mxu0 0.0
      %357 = vmatpush2.msra.mxu0 0.0
      %358 = vmatprep.subr.mxu0 0.0
      %359 = vmatpush2.msra.mxu0 0.0
      %360 = vmatprep.subr.mxu0 0.0
      %361 = vmatpush2.msra.mxu0 0.0
      %362 = vmatprep.subr.mxu0 0.0
      %363 = vmatpush2.msra.mxu0 0.0
      %364 = vmatprep.subr.mxu0 0.0
      %365 = vmatpush2.msra.mxu0 0.0
      %366 = vmatprep.mubr.f32.mxu0 0.0
      %367 = vmatmul.mubr.f32.gmra.mxu0 %v238
      %v368 = vpop.f32.mrf.mxu0
      %v369 = vadd.f32 0.0, %v368
      %v370 = vpop.f32.mrf.mxu0
      %v371 = vadd.f32 0.0, %v370
      %372 = vmatprep.mubr.f32.mxu0 0.0
      %373 = vmatmul.mubr.f32.gmra.mxu0 %v239
      %v374 = vpop.f32.mrf.mxu0
      %v375 = vadd.f32 0.0, %v374
      %v376 = vpop.f32.mrf.mxu0
      %v377 = vadd.f32 0.0, %v376
      %378 = vmatprep.mubr.f32.mxu0 0.0
      %379 = vmatmul.mubr.f32.gmra.mxu0 %v240
      %v380 = vpop.f32.mrf.mxu0
      %v381 = vadd.f32 0.0, %v380
      %v382 = vpop.f32.mrf.mxu0
      %v383 = vadd.f32 0.0, %v382
      %384 = vmatprep.mubr.f32.mxu0 0.0
      %385 = vmatmul.mubr.f32.gmra.mxu0 %v241
      %v386 = vpop.f32.mrf.mxu0
      %v387 = vadd.f32 0.0, %v386
      %v388 = vpop.f32.mrf.mxu0
      %v389 = vadd.f32 0.0, %v388
      %390 = vmatprep.mubr.f32.mxu0 0.0
      %391 = vmatmul.mubr.f32.gmra.mxu0 %v242
      %v392 = vpop.f32.mrf.mxu0
      %v393 = vadd.f32 0.0, %v392
      %v394 = vpop.f32.mrf.mxu0
      %v395 = vadd.f32 0.0, %v394
      %396 = vmatprep.mubr.f32.mxu0 0.0
      %397 = vmatmul.mubr.f32.gmra.mxu0 %v243
      %v398 = vpop.f32.mrf.mxu0
      %v399 = vadd.f32 0.0, %v398
      %v400 = vpop.f32.mrf.mxu0
      %v401 = vadd.f32 0.0, %v400
      %402 = vmatprep.mubr.f32.mxu0 0.0
      %403 = vmatmul.mubr.f32.gmra.mxu0 %v244
      %v404 = vpop.f32.mrf.mxu0
      %v405 = vadd.f32 0.0, %v404
      %v406 = vpop.f32.mrf.mxu0
      %v407 = vadd.f32 0.0, %v406
      %408 = vmatprep.mubr.f32.mxu0 0.0
      %409 = vmatmul.mubr.f32.gmra.mxu0 %v245
      %v410 = vpop.f32.mrf.mxu0
      %v411 = vadd.f32 0.0, %v410
      %v412 = vpop.f32.mrf.mxu0
      %v413 = vadd.f32 0.0, %v412
      %414 = vmatprep.mubr.f32.mxu0 0.0
      %415 = vmatmul.mubr.f32.gmra.mxu0 %v246
      %v416 = vpop.f32.mrf.mxu0
      %v417 = vadd.f32 0.0, %v416
      %v418 = vpop.f32.mrf.mxu0
      %v419 = vadd.f32 0.0, %v418
      %420 = vmatprep.mubr.f32.mxu0 0.0
      %421 = vmatmul.mubr.f32.gmra.mxu0 %v247
      %v422 = vpop.f32.mrf.mxu0
      %v423 = vadd.f32 0.0, %v422
      %v424 = vpop.f32.mrf.mxu0
      %v425 = vadd.f32 0.0, %v424
      %426 = vmatprep.mubr.f32.mxu0 0.0
      %427 = vmatmul.mubr.f32.gmra.mxu0 %v248
      %v428 = vpop.f32.mrf.mxu0
      %v429 = vadd.f32 0.0, %v428
      %v430 = vpop.f32.mrf.mxu0
      %v431 = vadd.f32 0.0, %v430
      %432 = vmatprep.mubr.f32.mxu0 0.0
      %433 = vmatmul.mubr.f32.gmra.mxu0 %v249
      %v434 = vpop.f32.mrf.mxu0
      %v435 = vadd.f32 0.0, %v434
      %v436 = vpop.f32.mrf.mxu0
      %v437 = vadd.f32 0.0, %v436
      %438 = vmatprep.mubr.f32.mxu0 0.0
      %439 = vmatmul.mubr.f32.gmra.mxu0 %v250
      %v440 = vpop.f32.mrf.mxu0
      %v441 = vadd.f32 0.0, %v440
      %v442 = vpop.f32.mrf.mxu0
      %v443 = vadd.f32 0.0, %v442
      %444 = vmatprep.mubr.f32.mxu0 0.0
      %445 = vmatmul.mubr.f32.gmra.mxu0 %v251
      %v446 = vpop.f32.mrf.mxu0
      %v447 = vadd.f32 0.0, %v446
      %v448 = vpop.f32.mrf.mxu0
      %v449 = vadd.f32 0.0, %v448
      %450 = vmatprep.mubr.f32.mxu0 0.0
      %451 = vmatmul.mubr.f32.gmra.mxu0 %v252
      %v452 = vpop.f32.mrf.mxu0
      %v453 = vadd.f32 0.0, %v452
      %v454 = vpop.f32.mrf.mxu0
      %v455 = vadd.f32 0.0, %v454
      %456 = vmatprep.mubr.f32.mxu0 0.0
      %457 = vmatmul.mubr.f32.gmra.mxu0 %v253
      %v458 = vpop.f32.mrf.mxu0
      %v459 = vadd.f32 0.0, %v458
      %v460 = vpop.f32.mrf.mxu0
      %v461 = vadd.f32 0.0, %v460
      %462 = vmatprep.mubr.f32.mxu0 0.0
      %463 = vmatmul.mubr.f32.gmra.mxu0 %v254
      %v464 = vpop.f32.mrf.mxu0
      %v465 = vadd.f32 0.0, %v464
      %v466 = vpop.f32.mrf.mxu0
      %v467 = vadd.f32 0.0, %v466
      %468 = vmatprep.mubr.f32.mxu0 0.0
      %469 = vmatmul.mubr.f32.gmra.mxu0 %v255
      %v470 = vpop.f32.mrf.mxu0
      %v471 = vadd.f32 0.0, %v470
      %v472 = vpop.f32.mrf.mxu0
      %v473 = vadd.f32 0.0, %v472
      %474 = vmatprep.mubr.f32.mxu0 0.0
      %475 = vmatmul.mubr.f32.gmra.mxu0 %v256
      %v476 = vpop.f32.mrf.mxu0
      %v477 = vadd.f32 0.0, %v476
      %v478 = vpop.f32.mrf.mxu0
      %v479 = vadd.f32 0.0, %v478
      %480 = vmatprep.mubr.f32.mxu0 0.0
      %481 = vmatmul.mubr.f32.gmra.mxu0 %v257
      %v482 = vpop.f32.mrf.mxu0
      %v483 = vadd.f32 0.0, %v482
      %v484 = vpop.f32.mrf.mxu0
      %v485 = vadd.f32 0.0, %v484
      %486 = vmatprep.mubr.f32.mxu0 0.0
      %487 = vmatmul.mubr.f32.gmra.mxu0 %v258
      %v488 = vpop.f32.mrf.mxu0
      %v489 = vadd.f32 0.0, %v488
      %v490 = vpop.f32.mrf.mxu0
      %v491 = vadd.f32 0.0, %v490
      %492 = vmatprep.mubr.f32.mxu0 0.0
      %493 = vmatmul.mubr.f32.gmra.mxu0 %v259
      %v494 = vpop.f32.mrf.mxu0
      %v495 = vadd.f32 0.0, %v494
      %v496 = vpop.f32.mrf.mxu0
      %v497 = vadd.f32 0.0, %v496
      %498 = vmatprep.mubr.f32.mxu0 0.0
      %499 = vmatmul.mubr.f32.gmra.mxu0 %v260
      %v500 = vpop.f32.mrf.mxu0
      %v501 = vadd.f32 0.0, %v500
      %v502 = vpop.f32.mrf.mxu0
      %v503 = vadd.f32 0.0, %v502
      %504 = vmatprep.mubr.f32.mxu0 0.0
      %505 = vmatmul.mubr.f32.gmra.mxu0 %v261
      %v506 = vpop.f32.mrf.mxu0
      %v507 = vadd.f32 0.0, %v506
      %v508 = vpop.f32.mrf.mxu0
      %v509 = vadd.f32 0.0, %v508
      %510 = vmatprep.mubr.f32.mxu0 0.0
      %511 = vmatmul.mubr.f32.gmra.mxu0 %v262
      %v512 = vpop.f32.mrf.mxu0
      %v513 = vadd.f32 0.0, %v512
      %v514 = vpop.f32.mrf.mxu0
      %v515 = vadd.f32 0.0, %v514
      %516 = vmatprep.mubr.f32.mxu0 0.0
      %517 = vmatmul.mubr.f32.gmra.mxu0 %v263
      %v518 = vpop.f32.mrf.mxu0
      %v519 = vadd.f32 0.0, %v518
      %v520 = vpop.f32.mrf.mxu0
      %v521 = vadd.f32 0.0, %v520
      %522 = vmatprep.mubr.f32.mxu0 0.0
      %523 = vmatmul.mubr.f32.gmra.mxu0 %v264
      %v524 = vpop.f32.mrf.mxu0
      %v525 = vadd.f32 0.0, %v524
      %v526 = vpop.f32.mrf.mxu0
      %v527 = vadd.f32 0.0, %v526
      %528 = vmatprep.mubr.f32.mxu0 0.0
      %529 = vmatmul.mubr.f32.gmra.mxu0 %v265
      %v530 = vpop.f32.mrf.mxu0
      %v531 = vadd.f32 0.0, %v530
      %v532 = vpop.f32.mrf.mxu0
      %v533 = vadd.f32 0.0, %v532
      %534 = vmatprep.mubr.f32.mxu0 0.0
      %535 = vmatmul.mubr.f32.gmra.mxu0 %v266
      %v536 = vpop.f32.mrf.mxu0
      %v537 = vadd.f32 0.0, %v536
      %v538 = vpop.f32.mrf.mxu0
      %v539 = vadd.f32 0.0, %v538
      %540 = vmatprep.mubr.f32.mxu0 0.0
      %541 = vmatmul.mubr.f32.gmra.mxu0 %v267
      %v542 = vpop.f32.mrf.mxu0
      %v543 = vadd.f32 0.0, %v542
      %v544 = vpop.f32.mrf.mxu0
      %v545 = vadd.f32 0.0, %v544
      %546 = vmatprep.mubr.f32.mxu0 0.0
      %547 = vmatmul.mubr.f32.gmra.mxu0 %v268
      %v548 = vpop.f32.mrf.mxu0
      %v549 = vadd.f32 0.0, %v548
      %v550 = vpop.f32.mrf.mxu0
      %v551 = vadd.f32 0.0, %v550
      %552 = vmatprep.mubr.f32.mxu0 0.0
      %553 = vmatmul.mubr.f32.gmra.mxu0 %v269
      %v554 = vpop.f32.mrf.mxu0
      %v555 = vadd.f32 0.0, %v554
      %v556 = vpop.f32.mrf.mxu0
      %v557 = vadd.f32 0.0, %v556
      %558 = vdwg.mxu0
      %v559 = vmul.f32 %v369, 1.442695
      %v560 = vpow.pop %v559
      %v561 = vmul.f32 %v371, 1.442695
      %v562 = vpow.pop %v561
      %v563 = vmul.f32 %v375, 1.442695
      %v564 = vpow.pop %v563
      %v565 = vmul.f32 %v377, 1.442695
      %v566 = vpow.pop %v565
      %v567 = vmul.f32 %v381, 1.442695
      %v568 = vpow.pop %v567
      %v569 = vmul.f32 %v383, 1.442695
      %v570 = vpow.pop %v569
      %v571 = vmul.f32 %v387, 1.442695
      %v572 = vpow.pop %v571
      %v573 = vmul.f32 %v389, 1.442695
      %v574 = vpow.pop %v573
      %v575 = vmul.f32 %v393, 1.442695
      %v576 = vpow.pop %v575
      %v577 = vmul.f32 %v395, 1.442695
      %v578 = vpow.pop %v577
      %v579 = vmul.f32 %v399, 1.442695
      %v580 = vpow.pop %v579
      %v581 = vmul.f32 %v401, 1.442695
      %v582 = vpow.pop %v581
      %v583 = vmul.f32 %v405, 1.442695
      %v584 = vpow.pop %v583
      %v585 = vmul.f32 %v407, 1.442695
      %v586 = vpow.pop %v585
      %v587 = vmul.f32 %v411, 1.442695
      %v588 = vpow.pop %v587
      %v589 = vmul.f32 %v413, 1.442695
      %v590 = vpow.pop %v589
      %v591 = vmul.f32 %v417, 1.442695
      %v592 = vpow.pop %v591
      %v593 = vmul.f32 %v419, 1.442695
      %v594 = vpow.pop %v593
      %v595 = vmul.f32 %v423, 1.442695
      %v596 = vpow.pop %v595
      %v597 = vmul.f32 %v425, 1.442695
      %v598 = vpow.pop %v597
      %v599 = vmul.f32 %v429, 1.442695
      %v600 = vpow.pop %v599
      %v601 = vmul.f32 %v431, 1.442695
      %v602 = vpow.pop %v601
      %v603 = vmul.f32 %v435, 1.442695
      %v604 = vpow.pop %v603
      %v605 = vmul.f32 %v437, 1.442695
      %v606 = vpow.pop %v605
      %v607 = vmul.f32 %v441, 1.442695
      %v608 = vpow.pop %v607
      %v609 = vmul.f32 %v443, 1.442695
      %v610 = vpow.pop %v609
      %v611 = vmul.f32 %v447, 1.442695
      %v612 = vpow.pop %v611
      %v613 = vmul.f32 %v449, 1.442695
      %v614 = vpow.pop %v613
      %v615 = vmul.f32 %v453, 1.442695
      %v616 = vpow.pop %v615
      %v617 = vmul.f32 %v455, 1.442695
      %v618 = vpow.pop %v617
      %v619 = vmul.f32 %v459, 1.442695
      %v620 = vpow.pop %v619
      %v621 = vmul.f32 %v461, 1.442695
      %v622 = vpow.pop %v621
      %v623 = vmul.f32 %v465, 1.442695
      %v624 = vpow.pop %v623
      %v625 = vmul.f32 %v467, 1.442695
      %v626 = vpow.pop %v625
      %v627 = vmul.f32 %v471, 1.442695
      %v628 = vpow.pop %v627
      %v629 = vmul.f32 %v473, 1.442695
      %v630 = vpow.pop %v629
      %v631 = vmul.f32 %v477, 1.442695
      %v632 = vpow.pop %v631
      %v633 = vmul.f32 %v479, 1.442695
      %v634 = vpow.pop %v633
      %v635 = vmul.f32 %v483, 1.442695
      %v636 = vpow.pop %v635
      %v637 = vmul.f32 %v485, 1.442695
      %v638 = vpow.pop %v637
      %v639 = vmul.f32 %v489, 1.442695
      %v640 = vpow.pop %v639
      %v641 = vmul.f32 %v491, 1.442695
      %v642 = vpow.pop %v641
      %v643 = vmul.f32 %v495, 1.442695
      %v644 = vpow.pop %v643
      %v645 = vmul.f32 %v497, 1.442695
      %v646 = vpow.pop %v645
      %v647 = vmul.f32 %v501, 1.442695
      %v648 = vpow.pop %v647
      %v649 = vmul.f32 %v503, 1.442695
      %v650 = vpow.pop %v649
      %v651 = vmul.f32 %v507, 1.442695
      %v652 = vpow.pop %v651
      %v653 = vmul.f32 %v509, 1.442695
      %v654 = vpow.pop %v653
      %v655 = vmul.f32 %v513, 1.442695
      %v656 = vpow.pop %v655
      %v657 = vmul.f32 %v515, 1.442695
      %v658 = vpow.pop %v657
      %v659 = vmul.f32 %v519, 1.442695
      %v660 = vpow.pop %v659
      %v661 = vmul.f32 %v521, 1.442695
      %v662 = vpow.pop %v661
      %v663 = vmul.f32 %v525, 1.442695
      %v664 = vpow.pop %v663
      %v665 = vmul.f32 %v527, 1.442695
      %v666 = vpow.pop %v665
      %v667 = vmul.f32 %v531, 1.442695
      %v668 = vpow.pop %v667
      %v669 = vmul.f32 %v533, 1.442695
      %v670 = vpow.pop %v669
      %v671 = vmul.f32 %v537, 1.442695
      %v672 = vpow.pop %v671
      %v673 = vmul.f32 %v539, 1.442695
      %v674 = vpow.pop %v673
      %v675 = vmul.f32 %v543, 1.442695
      %v676 = vpow.pop %v675
      %v677 = vmul.f32 %v545, 1.442695
      %v678 = vpow.pop %v677
      %v679 = vmul.f32 %v549, 1.442695
      %v680 = vpow.pop %v679
      %v681 = vmul.f32 %v551, 1.442695
      %v682 = vpow.pop %v681
      %v683 = vmul.f32 %v555, 1.442695
      %v684 = vpow.pop %v683
      %v685 = vmul.f32 %v557, 1.442695
      %v686 = vpow.pop %v685
      %v687 = vld [vmem:[%s3] sm:$0xff]
      %v688 = vld [vmem:[%s3 + $0x8] sm:$0xff]
      %v689 = vld [vmem:[%s3 + $0x10] sm:$0xff]
      %v690 = vld [vmem:[%s3 + $0x18] sm:$0xff]
      %v691 = vld [vmem:[%s3 + $0x20] sm:$0xff]
      %v692 = vld [vmem:[%s3 + $0x28] sm:$0xff]
      %v693 = vld [vmem:[%s3 + $0x30] sm:$0xff]
      %v694 = vld [vmem:[%s3 + $0x38] sm:$0xff]
      %v695 = vld [vmem:[%s3 + $0x40] sm:$0xff]
      %v696 = vld [vmem:[%s3 + $0x48] sm:$0xff]
      %v697 = vld [vmem:[%s3 + $0x50] sm:$0xff]
      %v698 = vld [vmem:[%s3 + $0x58] sm:$0xff]
      %v699 = vld [vmem:[%s3 + $0x60] sm:$0xff]
      %v700 = vld [vmem:[%s3 + $0x68] sm:$0xff]
      %v701 = vld [vmem:[%s3 + $0x70] sm:$0xff]
      %v702 = vld [vmem:[%s3 + $0x78] sm:$0xff]
      %v703 = vld [vmem:[%s3 + $0x80] sm:$0xff]
      %v704 = vld [vmem:[%s3 + $0x88] sm:$0xff]
      %v705 = vld [vmem:[%s3 + $0x90] sm:$0xff]
      %v706 = vld [vmem:[%s3 + $0x98] sm:$0xff]
      %v707 = vld [vmem:[%s3 + $0xa0] sm:$0xff]
      %v708 = vld [vmem:[%s3 + $0xa8] sm:$0xff]
      %v709 = vld [vmem:[%s3 + $0xb0] sm:$0xff]
      %v710 = vld [vmem:[%s3 + $0xb8] sm:$0xff]
      %v711 = vld [vmem:[%s3 + $0xc0] sm:$0xff]
      %v712 = vld [vmem:[%s3 + $0xc8] sm:$0xff]
      %v713 = vld [vmem:[%s3 + $0xd0] sm:$0xff]
      %v714 = vld [vmem:[%s3 + $0xd8] sm:$0xff]
      %v715 = vld [vmem:[%s3 + $0xe0] sm:$0xff]
      %v716 = vld [vmem:[%s3 + $0xe8] sm:$0xff]
      %v717 = vld [vmem:[%s3 + $0xf0] sm:$0xff]
      %v718 = vld [vmem:[%s3 + $0xf8] sm:$0xff]
      %v719 = vld [vmem:[%s3 + $0x100] sm:$0xff]
      %v720 = vld [vmem:[%s3 + $0x108] sm:$0xff]
      %v721 = vld [vmem:[%s3 + $0x110] sm:$0xff]
      %v722 = vld [vmem:[%s3 + $0x118] sm:$0xff]
      %v723 = vld [vmem:[%s3 + $0x120] sm:$0xff]
      %v724 = vld [vmem:[%s3 + $0x128] sm:$0xff]
      %v725 = vld [vmem:[%s3 + $0x130] sm:$0xff]
      %v726 = vld [vmem:[%s3 + $0x138] sm:$0xff]
      %v727 = vld [vmem:[%s3 + $0x140] sm:$0xff]
      %v728 = vld [vmem:[%s3 + $0x148] sm:$0xff]
      %v729 = vld [vmem:[%s3 + $0x150] sm:$0xff]
      %v730 = vld [vmem:[%s3 + $0x158] sm:$0xff]
      %v731 = vld [vmem:[%s3 + $0x160] sm:$0xff]
      %v732 = vld [vmem:[%s3 + $0x168] sm:$0xff]
      %v733 = vld [vmem:[%s3 + $0x170] sm:$0xff]
      %v734 = vld [vmem:[%s3 + $0x178] sm:$0xff]
      %v735 = vld [vmem:[%s3 + $0x180] sm:$0xff]
      %v736 = vld [vmem:[%s3 + $0x188] sm:$0xff]
      %v737 = vld [vmem:[%s3 + $0x190] sm:$0xff]
      %v738 = vld [vmem:[%s3 + $0x198] sm:$0xff]
      %v739 = vld [vmem:[%s3 + $0x1a0] sm:$0xff]
      %v740 = vld [vmem:[%s3 + $0x1a8] sm:$0xff]
      %v741 = vld [vmem:[%s3 + $0x1b0] sm:$0xff]
      %v742 = vld [vmem:[%s3 + $0x1b8] sm:$0xff]
      %v743 = vld [vmem:[%s3 + $0x1c0] sm:$0xff]
      %v744 = vld [vmem:[%s3 + $0x1c8] sm:$0xff]
      %v745 = vld [vmem:[%s3 + $0x1d0] sm:$0xff]
      %v746 = vld [vmem:[%s3 + $0x1d8] sm:$0xff]
      %v747 = vld [vmem:[%s3 + $0x1e0] sm:$0xff]
      %v748 = vld [vmem:[%s3 + $0x1e8] sm:$0xff]
      %v749 = vld [vmem:[%s3 + $0x1f0] sm:$0xff]
      %v750 = vld [vmem:[%s3 + $0x1f8] sm:$0xff]
      %v751 = vadd.f32 %v560, %v687
      %v752 = vadd.f32 %v562, %v688
      %v753 = vadd.f32 %v564, %v689
      %v754 = vadd.f32 %v566, %v690
      %v755 = vadd.f32 %v568, %v691
      %v756 = vadd.f32 %v570, %v692
      %v757 = vadd.f32 %v572, %v693
      %v758 = vadd.f32 %v574, %v694
      %v759 = vadd.f32 %v576, %v695
      %v760 = vadd.f32 %v578, %v696
      %v761 = vadd.f32 %v580, %v697
      %v762 = vadd.f32 %v582, %v698
      %v763 = vadd.f32 %v584, %v699
      %v764 = vadd.f32 %v586, %v700
      %v765 = vadd.f32 %v588, %v701
      %v766 = vadd.f32 %v590, %v702
      %v767 = vadd.f32 %v592, %v703
      %v768 = vadd.f32 %v594, %v704
      %v769 = vadd.f32 %v596, %v705
      %v770 = vadd.f32 %v598, %v706
      %v771 = vadd.f32 %v600, %v707
      %v772 = vadd.f32 %v602, %v708
      %v773 = vadd.f32 %v604, %v709
      %v774 = vadd.f32 %v606, %v710
      %v775 = vadd.f32 %v608, %v711
      %v776 = vadd.f32 %v610, %v712
      %v777 = vadd.f32 %v612, %v713
      %v778 = vadd.f32 %v614, %v714
      %v779 = vadd.f32 %v616, %v715
      %v780 = vadd.f32 %v618, %v716
      %v781 = vadd.f32 %v620, %v717
      %v782 = vadd.f32 %v622, %v718
      %v783 = vadd.f32 %v624, %v719
      %v784 = vadd.f32 %v626, %v720
      %v785 = vadd.f32 %v628, %v721
      %v786 = vadd.f32 %v630, %v722
      %v787 = vadd.f32 %v632, %v723
      %v788 = vadd.f32 %v634, %v724
      %v789 = vadd.f32 %v636, %v725
      %v790 = vadd.f32 %v638, %v726
      %v791 = vadd.f32 %v640, %v727
      %v792 = vadd.f32 %v642, %v728
      %v793 = vadd.f32 %v644, %v729
      %v794 = vadd.f32 %v646, %v730
      %v795 = vadd.f32 %v648, %v731
      %v796 = vadd.f32 %v650, %v732
      %v797 = vadd.f32 %v652, %v733
      %v798 = vadd.f32 %v654, %v734
      %v799 = vadd.f32 %v656, %v735
      %v800 = vadd.f32 %v658, %v736
      %v801 = vadd.f32 %v660, %v737
      %v802 = vadd.f32 %v662, %v738
      %v803 = vadd.f32 %v664, %v739
      %v804 = vadd.f32 %v666, %v740
      %v805 = vadd.f32 %v668, %v741
      %v806 = vadd.f32 %v670, %v742
      %v807 = vadd.f32 %v672, %v743
      %v808 = vadd.f32 %v674, %v744
      %v809 = vadd.f32 %v676, %v745
      %v810 = vadd.f32 %v678, %v746
      %v811 = vadd.f32 %v680, %v747
      %v812 = vadd.f32 %v682, %v748
      %v813 = vadd.f32 %v684, %v749
      %v814 = vadd.f32 %v686, %v750
      %815 = vst [vmem:[#allocation2] sm:$0xff] %v751
      %816 = vst [vmem:[#allocation2 + $0x8] sm:$0xff] %v752
      %817 = vst [vmem:[#allocation2 + $0x10] sm:$0xff] %v753
      %818 = vst [vmem:[#allocation2 + $0x18] sm:$0xff] %v754
      %819 = vst [vmem:[#allocation2 + $0x20] sm:$0xff] %v755
      %820 = vst [vmem:[#allocation2 + $0x28] sm:$0xff] %v756
      %821 = vst [vmem:[#allocation2 + $0x30] sm:$0xff] %v757
      %822 = vst [vmem:[#allocation2 + $0x38] sm:$0xff] %v758
      %823 = vst [vmem:[#allocation2 + $0x40] sm:$0xff] %v759
      %824 = vst [vmem:[#allocation2 + $0x48] sm:$0xff] %v760
      %825 = vst [vmem:[#allocation2 + $0x50] sm:$0xff] %v761
      %826 = vst [vmem:[#allocation2 + $0x58] sm:$0xff] %v762
      %827 = vst [vmem:[#allocation2 + $0x60] sm:$0xff] %v763
      %828 = vst [vmem:[#allocation2 + $0x68] sm:$0xff] %v764
      %829 = vst [vmem:[#allocation2 + $0x70] sm:$0xff] %v765
      %830 = vst [vmem:[#allocation2 + $0x78] sm:$0xff] %v766
      %831 = vst [vmem:[#allocation2 + $0x80] sm:$0xff] %v767
      %832 = vst [vmem:[#allocation2 + $0x88] sm:$0xff] %v768
      %833 = vst [vmem:[#allocation2 + $0x90] sm:$0xff] %v769
      %834 = vst [vmem:[#allocation2 + $0x98] sm:$0xff] %v770
      %835 = vst [vmem:[#allocation2 + $0xa0] sm:$0xff] %v771
      %836 = vst [vmem:[#allocation2 + $0xa8] sm:$0xff] %v772
      %837 = vst [vmem:[#allocation2 + $0xb0] sm:$0xff] %v773
      %838 = vst [vmem:[#allocation2 + $0xb8] sm:$0xff] %v774
      %839 = vst [vmem:[#allocation2 + $0xc0] sm:$0xff] %v775
      %840 = vst [vmem:[#allocation2 + $0xc8] sm:$0xff] %v776
      %841 = vst [vmem:[#allocation2 + $0xd0] sm:$0xff] %v777
      %842 = vst [vmem:[#allocation2 + $0xd8] sm:$0xff] %v778
      %843 = vst [vmem:[#allocation2 + $0xe0] sm:$0xff] %v779
      %844 = vst [vmem:[#allocation2 + $0xe8] sm:$0xff] %v780
      %845 = vst [vmem:[#allocation2 + $0xf0] sm:$0xff] %v781
      %846 = vst [vmem:[#allocation2 + $0xf8] sm:$0xff] %v782
      %847 = vst [vmem:[#allocation2 + $0x100] sm:$0xff] %v783
      %848 = vst [vmem:[#allocation2 + $0x108] sm:$0xff] %v784
      %849 = vst [vmem:[#allocation2 + $0x110] sm:$0xff] %v785
      %850 = vst [vmem:[#allocation2 + $0x118] sm:$0xff] %v786
      %851 = vst [vmem:[#allocation2 + $0x120] sm:$0xff] %v787
      %852 = vst [vmem:[#allocation2 + $0x128] sm:$0xff] %v788
      %853 = vst [vmem:[#allocation2 + $0x130] sm:$0xff] %v789
      %854 = vst [vmem:[#allocation2 + $0x138] sm:$0xff] %v790
      %855 = vst [vmem:[#allocation2 + $0x140] sm:$0xff] %v791
      %856 = vst [vmem:[#allocation2 + $0x148] sm:$0xff] %v792
      %857 = vst [vmem:[#allocation2 + $0x150] sm:$0xff] %v793
      %858 = vst [vmem:[#allocation2 + $0x158] sm:$0xff] %v794
      %859 = vst [vmem:[#allocation2 + $0x160] sm:$0xff] %v795
      %860 = vst [vmem:[#allocation2 + $0x168] sm:$0xff] %v796
      %861 = vst [vmem:[#allocation2 + $0x170] sm:$0xff] %v797
      %862 = vst [vmem:[#allocation2 + $0x178] sm:$0xff] %v798
      %863 = vst [vmem:[#allocation2 + $0x180] sm:$0xff] %v799
      %864 = vst [vmem:[#allocation2 + $0x188] sm:$0xff] %v800
      %865 = vst [vmem:[#allocation2 + $0x190] sm:$0xff] %v801
      %866 = vst [vmem:[#allocation2 + $0x198] sm:$0xff] %v802
      %867 = vst [vmem:[#allocation2 + $0x1a0] sm:$0xff] %v803
      %868 = vst [vmem:[#allocation2 + $0x1a8] sm:$0xff] %v804
      %869 = vst [vmem:[#allocation2 + $0x1b0] sm:$0xff] %v805
      %870 = vst [vmem:[#allocation2 + $0x1b8] sm:$0xff] %v806
      %871 = vst [vmem:[#allocation2 + $0x1c0] sm:$0xff] %v807
      %872 = vst [vmem:[#allocation2 + $0x1c8] sm:$0xff] %v808
      %873 = vst [vmem:[#allocation2 + $0x1d0] sm:$0xff] %v809
      %874 = vst [vmem:[#allocation2 + $0x1d8] sm:$0xff] %v810
      %875 = vst [vmem:[#allocation2 + $0x1e0] sm:$0xff] %v811
      %876 = vst [vmem:[#allocation2 + $0x1e8] sm:$0xff] %v812
      %877 = vst [vmem:[#allocation2 + $0x1f0] sm:$0xff] %v813
      %878 = vst [vmem:[#allocation2 + $0x1f8] sm:$0xff] %v814
      %v879 = vld [vmem:[%s232] sm:$0xff]
      %v880 = vmax.f32 %v879, 1e-05
      %v881 = vmin.f32 %v880, 1.0
      %v882 = vlog2.pop %v881
      %v883 = vmul.f32 %v882, 0.6931472
      %v885 = vcombine.high %v883, %v883
      %vm887 = vcmask 1043456
      %v888 = vsel %vm887, %v883, -inf
      %v889 = vrot.slane %v888, 4
      %v890 = vmax.f32 %v888, %v889
      %v891 = vrot.slane %v890, 2
      %v892 = vmax.f32 %v890, %v891
      %v893 = vrot.slane %v892, 1
      %v894 = vmax.f32 %v892, %v893
      %v895 = vsel %vm887, %v885, -inf
      %v896 = vrot.slane %v895, 4
      %v897 = vmax.f32 %v895, %v896
      %v898 = vrot.slane %v897, 2
      %v899 = vmax.f32 %v897, %v898
      %v900 = vrot.slane %v899, 1
      %v901 = vmax.f32 %v899, %v900
      %v904 = vcombine.low %v894, %v901
      %v906 = vsub.f32 %v883, %v904
      %v907 = vmul.f32 %v906, 1.442695
      %v908 = vpow.pop %v907
      %v910 = vcombine.high %v908, %v908
      %v912 = vsel %vm887, %v908, 0.0
      %v913 = vrot.slane %v912, 4
      %v914 = vadd.f32 %v912, %v913
      %v915 = vrot.slane %v914, 2
      %v916 = vadd.f32 %v914, %v915
      %v917 = vrot.slane %v916, 1
      %v918 = vadd.f32 %v916, %v917
      %v919 = vsel %vm887, %v910, 0.0
      %v920 = vrot.slane %v919, 4
      %v921 = vadd.f32 %v919, %v920
      %v922 = vrot.slane %v921, 2
      %v923 = vadd.f32 %v921, %v922
      %v924 = vrot.slane %v923, 1
      %v925 = vadd.f32 %v923, %v924
      %v928 = vcombine.low %v918, %v925
      %v930 = vrcp.pop %v928
      %v931 = vmul.f32 %v908, %v930
      %v932 = vld [vmem:[#allocation2] sm:$0xff]
      %v933 = vld [vmem:[#allocation2 + $0x8] sm:$0xff]
      %v934 = vld [vmem:[#allocation2 + $0x10] sm:$0xff]
      %v935 = vld [vmem:[#allocation2 + $0x18] sm:$0xff]
      %v936 = vld [vmem:[#allocation2 + $0x20] sm:$0xff]
      %v937 = vld [vmem:[#allocation2 + $0x28] sm:$0xff]
      %v938 = vld [vmem:[#allocation2 + $0x30] sm:$0xff]
      %v939 = vld [vmem:[#allocation2 + $0x38] sm:$0xff]
      %v940 = vld [vmem:[#allocation2 + $0x40] sm:$0xff]
      %v941 = vld [vmem:[#allocation2 + $0x48] sm:$0xff]
      %v942 = vld [vmem:[#allocation2 + $0x50] sm:$0xff]
      %v943 = vld [vmem:[#allocation2 + $0x58] sm:$0xff]
      %v944 = vld [vmem:[#allocation2 + $0x60] sm:$0xff]
      %v945 = vld [vmem:[#allocation2 + $0x68] sm:$0xff]
      %v946 = vld [vmem:[#allocation2 + $0x70] sm:$0xff]
      %v947 = vld [vmem:[#allocation2 + $0x78] sm:$0xff]
      %v948 = vld [vmem:[#allocation2 + $0x80] sm:$0xff]
      %v949 = vld [vmem:[#allocation2 + $0x88] sm:$0xff]
      %v950 = vld [vmem:[#allocation2 + $0x90] sm:$0xff]
      %v951 = vld [vmem:[#allocation2 + $0x98] sm:$0xff]
      %v952 = vld [vmem:[#allocation2 + $0xa0] sm:$0xff]
      %v953 = vld [vmem:[#allocation2 + $0xa8] sm:$0xff]
      %v954 = vld [vmem:[#allocation2 + $0xb0] sm:$0xff]
      %v955 = vld [vmem:[#allocation2 + $0xb8] sm:$0xff]
      %v956 = vld [vmem:[#allocation2 + $0xc0] sm:$0xff]
      %v957 = vld [vmem:[#allocation2 + $0xc8] sm:$0xff]
      %v958 = vld [vmem:[#allocation2 + $0xd0] sm:$0xff]
      %v959 = vld [vmem:[#allocation2 + $0xd8] sm:$0xff]
      %v960 = vld [vmem:[#allocation2 + $0xe0] sm:$0xff]
      %v961 = vld [vmem:[#allocation2 + $0xe8] sm:$0xff]
      %v962 = vld [vmem:[#allocation2 + $0xf0] sm:$0xff]
      %v963 = vld [vmem:[#allocation2 + $0xf8] sm:$0xff]
      %v964 = vld [vmem:[#allocation2 + $0x100] sm:$0xff]
      %v965 = vld [vmem:[#allocation2 + $0x108] sm:$0xff]
      %v966 = vld [vmem:[#allocation2 + $0x110] sm:$0xff]
      %v967 = vld [vmem:[#allocation2 + $0x118] sm:$0xff]
      %v968 = vld [vmem:[#allocation2 + $0x120] sm:$0xff]
      %v969 = vld [vmem:[#allocation2 + $0x128] sm:$0xff]
      %v970 = vld [vmem:[#allocation2 + $0x130] sm:$0xff]
      %v971 = vld [vmem:[#allocation2 + $0x138] sm:$0xff]
      %v972 = vld [vmem:[#allocation2 + $0x140] sm:$0xff]
      %v973 = vld [vmem:[#allocation2 + $0x148] sm:$0xff]
      %v974 = vld [vmem:[#allocation2 + $0x150] sm:$0xff]
      %v975 = vld [vmem:[#allocation2 + $0x158] sm:$0xff]
      %v976 = vld [vmem:[#allocation2 + $0x160] sm:$0xff]
      %v977 = vld [vmem:[#allocation2 + $0x168] sm:$0xff]
      %v978 = vld [vmem:[#allocation2 + $0x170] sm:$0xff]
      %v979 = vld [vmem:[#allocation2 + $0x178] sm:$0xff]
      %v980 = vld [vmem:[#allocation2 + $0x180] sm:$0xff]
      %v981 = vld [vmem:[#allocation2 + $0x188] sm:$0xff]
      %v982 = vld [vmem:[#allocation2 + $0x190] sm:$0xff]
      %v983 = vld [vmem:[#allocation2 + $0x198] sm:$0xff]
      %v984 = vld [vmem:[#allocation2 + $0x1a0] sm:$0xff]
      %v985 = vld [vmem:[#allocation2 + $0x1a8] sm:$0xff]
      %v986 = vld [vmem:[#allocation2 + $0x1b0] sm:$0xff]
      %v987 = vld [vmem:[#allocation2 + $0x1b8] sm:$0xff]
      %v988 = vld [vmem:[#allocation2 + $0x1c0] sm:$0xff]
      %v989 = vld [vmem:[#allocation2 + $0x1c8] sm:$0xff]
      %v990 = vld [vmem:[#allocation2 + $0x1d0] sm:$0xff]
      %v991 = vld [vmem:[#allocation2 + $0x1d8] sm:$0xff]
      %v992 = vld [vmem:[#allocation2 + $0x1e0] sm:$0xff]
      %v993 = vld [vmem:[#allocation2 + $0x1e8] sm:$0xff]
      %v994 = vld [vmem:[#allocation2 + $0x1f0] sm:$0xff]
      %v995 = vld [vmem:[#allocation2 + $0x1f8] sm:$0xff]
      %v997 = vcombine.high %v931, %v931
      %999 = vmatprep.subr.mxu0 %v963
      %1000 = vmatpush1.msra.mxu0 %v962
      %1001 = vmatprep.subr.mxu0 %v961
      %1002 = vmatpush1.msra.mxu0 %v960
      %1003 = vmatprep.subr.mxu0 %v959
      %1004 = vmatpush1.msra.mxu0 %v958
      %1005 = vmatprep.subr.mxu0 %v957
      %1006 = vmatpush1.msra.mxu0 %v956
      %1007 = vmatprep.subr.mxu0 %v955
      %1008 = vmatpush1.msra.mxu0 %v954
      %1009 = vmatprep.subr.mxu0 %v953
      %1010 = vmatpush1.msra.mxu0 %v952
      %1011 = vmatprep.subr.mxu0 %v951
      %1012 = vmatpush1.msra.mxu0 %v950
      %1013 = vmatprep.subr.mxu0 %v949
      %1014 = vmatpush1.msra.mxu0 %v948
      %1015 = vmatprep.subr.mxu0 %v947
      %1016 = vmatpush1.msra.mxu0 %v946
      %1017 = vmatprep.subr.mxu0 %v945
      %1018 = vmatpush1.msra.mxu0 %v944
      %1019 = vmatprep.subr.mxu0 %v943
      %1020 = vmatpush1.msra.mxu0 %v942
      %1021 = vmatprep.subr.mxu0 %v941
      %1022 = vmatpush1.msra.mxu0 %v940
      %1023 = vmatprep.subr.mxu0 %v939
      %1024 = vmatpush1.msra.mxu0 %v938
      %1025 = vmatprep.subr.mxu0 %v937
      %1026 = vmatpush1.msra.mxu0 %v936
      %1027 = vmatprep.subr.mxu0 %v935
      %1028 = vmatpush1.msra.mxu0 %v934
      %1029 = vmatprep.subr.mxu0 %v933
      %1030 = vmatpush1.msra.mxu0 %v932
      %1031 = vmatprep.subr.mxu0 %v995
      %1032 = vmatpush2.msra.mxu0 %v994
      %1033 = vmatprep.subr.mxu0 %v993
      %1034 = vmatpush2.msra.mxu0 %v992
      %1035 = vmatprep.subr.mxu0 %v991
      %1036 = vmatpush2.msra.mxu0 %v990
      %1037 = vmatprep.subr.mxu0 %v989
      %1038 = vmatpush2.msra.mxu0 %v988
      %1039 = vmatprep.subr.mxu0 %v987
      %1040 = vmatpush2.msra.mxu0 %v986
      %1041 = vmatprep.subr.mxu0 %v985
      %1042 = vmatpush2.msra.mxu0 %v984
      %1043 = vmatprep.subr.mxu0 %v983
      %1044 = vmatpush2.msra.mxu0 %v982
      %1045 = vmatprep.subr.mxu0 %v981
      %1046 = vmatpush2.msra.mxu0 %v980
      %1047 = vmatprep.subr.mxu0 %v979
      %1048 = vmatpush2.msra.mxu0 %v978
      %1049 = vmatprep.subr.mxu0 %v977
      %1050 = vmatpush2.msra.mxu0 %v976
      %1051 = vmatprep.subr.mxu0 %v975
      %1052 = vmatpush2.msra.mxu0 %v974
      %1053 = vmatprep.subr.mxu0 %v973
      %1054 = vmatpush2.msra.mxu0 %v972
      %1055 = vmatprep.subr.mxu0 %v971
      %1056 = vmatpush2.msra.mxu0 %v970
      %1057 = vmatprep.subr.mxu0 %v969
      %1058 = vmatpush2.msra.mxu0 %v968
      %1059 = vmatprep.subr.mxu0 %v967
      %1060 = vmatpush2.msra.mxu0 %v966
      %1061 = vmatprep.subr.mxu0 %v965
      %1062 = vmatpush2.msra.mxu0 %v964
      %1063 = vmatprep.mubr.f32.mxu0 %v997
      %1064 = vmatmul.mubr.f32.gmra.mxu0 %v931
      %v1065 = vpop.f32.mrf.mxu0
      %v1066 = vadd.f32 0.0, %v1065
      %v1067 = vpop.f32.mrf.mxu0
      %v1068 = vadd.f32 0.0, %v1067
      %1069 = vdwg.mxu0
      %v1072 = vcombine.low %v1066, %v1068
      %v1074 = vadd.f32 %v883, %v1072
      %v1076 = vcombine.high %v1074, %v1074
      %v1078 = vsel %vm887, %v1074, -inf
      %v1079 = vrot.slane %v1078, 4
      %v1080 = vmax.f32 %v1078, %v1079
      %v1081 = vrot.slane %v1080, 2
      %v1082 = vmax.f32 %v1080, %v1081
      %v1083 = vrot.slane %v1082, 1
      %v1084 = vmax.f32 %v1082, %v1083
      %v1085 = vsel %vm887, %v1076, -inf
      %v1086 = vrot.slane %v1085, 4
      %v1087 = vmax.f32 %v1085, %v1086
      %v1088 = vrot.slane %v1087, 2
      %v1089 = vmax.f32 %v1087, %v1088
      %v1090 = vrot.slane %v1089, 1
      %v1091 = vmax.f32 %v1089, %v1090
      %v1094 = vcombine.low %v1084, %v1091
      %v1096 = vsub.f32 %v1074, %v1094
      %v1097 = vmul.f32 %v1096, 1.442695
      %v1098 = vpow.pop %v1097
      %v1100 = vcombine.high %v1098, %v1098
      %v1102 = vsel %vm887, %v1098, 0.0
      %v1103 = vrot.slane %v1102, 4
      %v1104 = vadd.f32 %v1102, %v1103
      %v1105 = vrot.slane %v1104, 2
      %v1106 = vadd.f32 %v1104, %v1105
      %v1107 = vrot.slane %v1106, 1
      %v1108 = vadd.f32 %v1106, %v1107
      %v1109 = vsel %vm887, %v1100, 0.0
      %v1110 = vrot.slane %v1109, 4
      %v1111 = vadd.f32 %v1109, %v1110
      %v1112 = vrot.slane %v1111, 2
      %v1113 = vadd.f32 %v1111, %v1112
      %v1114 = vrot.slane %v1113, 1
      %v1115 = vadd.f32 %v1113, %v1114
      %v1118 = vcombine.low %v1108, %v1115
      %v1120 = vrcp.pop %v1118
      %v1121 = vmul.f32 %v1098, %v1120
      %v1123 = vcombine.high %v1121, %v1121
      %1125 = vmatprep.subr.mxu0 %v963
      %1126 = vmatpush1.msra.mxu0 %v962
      %1127 = vmatprep.subr.mxu0 %v961
      %1128 = vmatpush1.msra.mxu0 %v960
      %1129 = vmatprep.subr.mxu0 %v959
      %1130 = vmatpush1.msra.mxu0 %v958
      %1131 = vmatprep.subr.mxu0 %v957
      %1132 = vmatpush1.msra.mxu0 %v956
      %1133 = vmatprep.subr.mxu0 %v955
      %1134 = vmatpush1.msra.mxu0 %v954
      %1135 = vmatprep.subr.mxu0 %v953
      %1136 = vmatpush1.msra.mxu0 %v952
      %1137 = vmatprep.subr.mxu0 %v951
      %1138 = vmatpush1.msra.mxu0 %v950
      %1139 = vmatprep.subr.mxu0 %v949
      %1140 = vmatpush1.msra.mxu0 %v948
      %1141 = vmatprep.subr.mxu0 %v947
      %1142 = vmatpush1.msra.mxu0 %v946
      %1143 = vmatprep.subr.mxu0 %v945
      %1144 = vmatpush1.msra.mxu0 %v944
      %1145 = vmatprep.subr.mxu0 %v943
      %1146 = vmatpush1.msra.mxu0 %v942
      %1147 = vmatprep.subr.mxu0 %v941
      %1148 = vmatpush1.msra.mxu0 %v940
      %1149 = vmatprep.subr.mxu0 %v939
      %1150 = vmatpush1.msra.mxu0 %v938
      %1151 = vmatprep.subr.mxu0 %v937
      %1152 = vmatpush1.msra.mxu0 %v936
      %1153 = vmatprep.subr.mxu0 %v935
      %1154 = vmatpush1.msra.mxu0 %v934
      %1155 = vmatprep.subr.mxu0 %v933
      %1156 = vmatpush1.msra.mxu0 %v932
      %1157 = vmatprep.subr.mxu0 %v995
      %1158 = vmatpush2.msra.mxu0 %v994
      %1159 = vmatprep.subr.mxu0 %v993
      %1160 = vmatpush2.msra.mxu0 %v992
      %1161 = vmatprep.subr.mxu0 %v991
      %1162 = vmatpush2.msra.mxu0 %v990
      %1163 = vmatprep.subr.mxu0 %v989
      %1164 = vmatpush2.msra.mxu0 %v988
      %1165 = vmatprep.subr.mxu0 %v987
      %1166 = vmatpush2.msra.mxu0 %v986
      %1167 = vmatprep.subr.mxu0 %v985
      %1168 = vmatpush2.msra.mxu0 %v984
      %1169 = vmatprep.subr.mxu0 %v983
      %1170 = vmatpush2.msra.mxu0 %v982
      %1171 = vmatprep.subr.mxu0 %v981
      %1172 = vmatpush2.msra.mxu0 %v980
      %1173 = vmatprep.subr.mxu0 %v979
      %1174 = vmatpush2.msra.mxu0 %v978
      %1175 = vmatprep.subr.mxu0 %v977
      %1176 = vmatpush2.msra.mxu0 %v976
      %1177 = vmatprep.subr.mxu0 %v975
      %1178 = vmatpush2.msra.mxu0 %v974
      %1179 = vmatprep.subr.mxu0 %v973
      %1180 = vmatpush2.msra.mxu0 %v972
      %1181 = vmatprep.subr.mxu0 %v971
      %1182 = vmatpush2.msra.mxu0 %v970
      %1183 = vmatprep.subr.mxu0 %v969
      %1184 = vmatpush2.msra.mxu0 %v968
      %1185 = vmatprep.subr.mxu0 %v967
      %1186 = vmatpush2.msra.mxu0 %v966
      %1187 = vmatprep.subr.mxu0 %v965
      %1188 = vmatpush2.msra.mxu0 %v964
      %1189 = vmatprep.mubr.f32.mxu0 %v1123
      %1190 = vmatmul.mubr.f32.gmra.mxu0 %v1121
      %v1191 = vpop.f32.mrf.mxu0
      %v1192 = vadd.f32 0.0, %v1191
      %v1193 = vpop.f32.mrf.mxu0
      %v1194 = vadd.f32 0.0, %v1193
      %1195 = vdwg.mxu0
      %v1198 = vcombine.low %v1192, %v1194
      %v1200 = vadd.f32 %v883, %v1198
      %v1202 = vcombine.high %v1200, %v1200
      %v1204 = vsel %vm887, %v1200, -inf
      %v1205 = vrot.slane %v1204, 4
      %v1206 = vmax.f32 %v1204, %v1205
      %v1207 = vrot.slane %v1206, 2
      %v1208 = vmax.f32 %v1206, %v1207
      %v1209 = vrot.slane %v1208, 1
      %v1210 = vmax.f32 %v1208, %v1209
      %v1211 = vsel %vm887, %v1202, -inf
      %v1212 = vrot.slane %v1211, 4
      %v1213 = vmax.f32 %v1211, %v1212
      %v1214 = vrot.slane %v1213, 2
      %v1215 = vmax.f32 %v1213, %v1214
      %v1216 = vrot.slane %v1215, 1
      %v1217 = vmax.f32 %v1215, %v1216
      %v1220 = vcombine.low %v1210, %v1217
      %v1222 = vsub.f32 %v1200, %v1220
      %v1223 = vmul.f32 %v1222, 1.442695
      %v1224 = vpow.pop %v1223
      %v1226 = vcombine.high %v1224, %v1224
      %v1228 = vsel %vm887, %v1224, 0.0
      %v1229 = vrot.slane %v1228, 4
      %v1230 = vadd.f32 %v1228, %v1229
      %v1231 = vrot.slane %v1230, 2
      %v1232 = vadd.f32 %v1230, %v1231
      %v1233 = vrot.slane %v1232, 1
      %v1234 = vadd.f32 %v1232, %v1233
      %v1235 = vsel %vm887, %v1226, 0.0
      %v1236 = vrot.slane %v1235, 4
      %v1237 = vadd.f32 %v1235, %v1236
      %v1238 = vrot.slane %v1237, 2
      %v1239 = vadd.f32 %v1237, %v1238
      %v1240 = vrot.slane %v1239, 1
      %v1241 = vadd.f32 %v1239, %v1240
      %v1244 = vcombine.low %v1234, %v1241
      %v1246 = vrcp.pop %v1244
      %v1247 = vmul.f32 %v1224, %v1246
      %v1249 = vcombine.high %v1247, %v1247
      %1251 = vmatprep.subr.mxu0 %v963
      %1252 = vmatpush1.msra.mxu0 %v962
      %1253 = vmatprep.subr.mxu0 %v961
      %1254 = vmatpush1.msra.mxu0 %v960
      %1255 = vmatprep.subr.mxu0 %v959
      %1256 = vmatpush1.msra.mxu0 %v958
      %1257 = vmatprep.subr.mxu0 %v957
      %1258 = vmatpush1.msra.mxu0 %v956
      %1259 = vmatprep.subr.mxu0 %v955
      %1260 = vmatpush1.msra.mxu0 %v954
      %1261 = vmatprep.subr.mxu0 %v953
      %1262 = vmatpush1.msra.mxu0 %v952
      %1263 = vmatprep.subr.mxu0 %v951
      %1264 = vmatpush1.msra.mxu0 %v950
      %1265 = vmatprep.subr.mxu0 %v949
      %1266 = vmatpush1.msra.mxu0 %v948
      %1267 = vmatprep.subr.mxu0 %v947
      %1268 = vmatpush1.msra.mxu0 %v946
      %1269 = vmatprep.subr.mxu0 %v945
      %1270 = vmatpush1.msra.mxu0 %v944
      %1271 = vmatprep.subr.mxu0 %v943
      %1272 = vmatpush1.msra.mxu0 %v942
      %1273 = vmatprep.subr.mxu0 %v941
      %1274 = vmatpush1.msra.mxu0 %v940
      %1275 = vmatprep.subr.mxu0 %v939
      %1276 = vmatpush1.msra.mxu0 %v938
      %1277 = vmatprep.subr.mxu0 %v937
      %1278 = vmatpush1.msra.mxu0 %v936
      %1279 = vmatprep.subr.mxu0 %v935
      %1280 = vmatpush1.msra.mxu0 %v934
      %1281 = vmatprep.subr.mxu0 %v933
      %1282 = vmatpush1.msra.mxu0 %v932
      %1283 = vmatprep.subr.mxu0 %v995
      %1284 = vmatpush2.msra.mxu0 %v994
      %1285 = vmatprep.subr.mxu0 %v993
      %1286 = vmatpush2.msra.mxu0 %v992
      %1287 = vmatprep.subr.mxu0 %v991
      %1288 = vmatpush2.msra.mxu0 %v990
      %1289 = vmatprep.subr.mxu0 %v989
      %1290 = vmatpush2.msra.mxu0 %v988
      %1291 = vmatprep.subr.mxu0 %v987
      %1292 = vmatpush2.msra.mxu0 %v986
      %1293 = vmatprep.subr.mxu0 %v985
      %1294 = vmatpush2.msra.mxu0 %v984
      %1295 = vmatprep.subr.mxu0 %v983
      %1296 = vmatpush2.msra.mxu0 %v982
      %1297 = vmatprep.subr.mxu0 %v981
      %1298 = vmatpush2.msra.mxu0 %v980
      %1299 = vmatprep.subr.mxu0 %v979
      %1300 = vmatpush2.msra.mxu0 %v978
      %1301 = vmatprep.subr.mxu0 %v977
      %1302 = vmatpush2.msra.mxu0 %v976
      %1303 = vmatprep.subr.mxu0 %v975
      %1304 = vmatpush2.msra.mxu0 %v974
      %1305 = vmatprep.subr.mxu0 %v973
      %1306 = vmatpush2.msra.mxu0 %v972
      %1307 = vmatprep.subr.mxu0 %v971
      %1308 = vmatpush2.msra.mxu0 %v970
      %1309 = vmatprep.subr.mxu0 %v969
      %1310 = vmatpush2.msra.mxu0 %v968
      %1311 = vmatprep.subr.mxu0 %v967
      %1312 = vmatpush2.msra.mxu0 %v966
      %1313 = vmatprep.subr.mxu0 %v965
      %1314 = vmatpush2.msra.mxu0 %v964
      %1315 = vmatprep.mubr.f32.mxu0 %v1249
      %1316 = vmatmul.mubr.f32.gmra.mxu0 %v1247
      %v1317 = vpop.f32.mrf.mxu0
      %v1318 = vadd.f32 0.0, %v1317
      %v1319 = vpop.f32.mrf.mxu0
      %v1320 = vadd.f32 0.0, %v1319
      %1321 = vdwg.mxu0
      %v1324 = vcombine.low %v1318, %v1320
      %v1326 = vadd.f32 %v883, %v1324
      %v1328 = vcombine.high %v1326, %v1326
      %v1330 = vsel %vm887, %v1326, -inf
      %v1331 = vrot.slane %v1330, 4
      %v1332 = vmax.f32 %v1330, %v1331
      %v1333 = vrot.slane %v1332, 2
      %v1334 = vmax.f32 %v1332, %v1333
      %v1335 = vrot.slane %v1334, 1
      %v1336 = vmax.f32 %v1334, %v1335
      %v1337 = vsel %vm887, %v1328, -inf
      %v1338 = vrot.slane %v1337, 4
      %v1339 = vmax.f32 %v1337, %v1338
      %v1340 = vrot.slane %v1339, 2
      %v1341 = vmax.f32 %v1339, %v1340
      %v1342 = vrot.slane %v1341, 1
      %v1343 = vmax.f32 %v1341, %v1342
      %v1346 = vcombine.low %v1336, %v1343
      %v1348 = vsub.f32 %v1326, %v1346
      %v1349 = vmul.f32 %v1348, 1.442695
      %v1350 = vpow.pop %v1349
      %v1352 = vcombine.high %v1350, %v1350
      %v1354 = vsel %vm887, %v1350, 0.0
      %v1355 = vrot.slane %v1354, 4
      %v1356 = vadd.f32 %v1354, %v1355
      %v1357 = vrot.slane %v1356, 2
      %v1358 = vadd.f32 %v1356, %v1357
      %v1359 = vrot.slane %v1358, 1
      %v1360 = vadd.f32 %v1358, %v1359
      %v1361 = vsel %vm887, %v1352, 0.0
      %v1362 = vrot.slane %v1361, 4
      %v1363 = vadd.f32 %v1361, %v1362
      %v1364 = vrot.slane %v1363, 2
      %v1365 = vadd.f32 %v1363, %v1364
      %v1366 = vrot.slane %v1365, 1
      %v1367 = vadd.f32 %v1365, %v1366
      %v1370 = vcombine.low %v1360, %v1367
      %v1372 = vrcp.pop %v1370
      %v1373 = vmul.f32 %v1350, %v1372
      %v1375 = vcombine.high %v1373, %v1373
      %1377 = vmatprep.subr.mxu0 %v963
      %1378 = vmatpush1.msra.mxu0 %v962
      %1379 = vmatprep.subr.mxu0 %v961
      %1380 = vmatpush1.msra.mxu0 %v960
      %1381 = vmatprep.subr.mxu0 %v959
      %1382 = vmatpush1.msra.mxu0 %v958
      %1383 = vmatprep.subr.mxu0 %v957
      %1384 = vmatpush1.msra.mxu0 %v956
      %1385 = vmatprep.subr.mxu0 %v955
      %1386 = vmatpush1.msra.mxu0 %v954
      %1387 = vmatprep.subr.mxu0 %v953
      %1388 = vmatpush1.msra.mxu0 %v952
      %1389 = vmatprep.subr.mxu0 %v951
      %1390 = vmatpush1.msra.mxu0 %v950
      %1391 = vmatprep.subr.mxu0 %v949
      %1392 = vmatpush1.msra.mxu0 %v948
      %1393 = vmatprep.subr.mxu0 %v947
      %1394 = vmatpush1.msra.mxu0 %v946
      %1395 = vmatprep.subr.mxu0 %v945
      %1396 = vmatpush1.msra.mxu0 %v944
      %1397 = vmatprep.subr.mxu0 %v943
      %1398 = vmatpush1.msra.mxu0 %v942
      %1399 = vmatprep.subr.mxu0 %v941
      %1400 = vmatpush1.msra.mxu0 %v940
      %1401 = vmatprep.subr.mxu0 %v939
      %1402 = vmatpush1.msra.mxu0 %v938
      %1403 = vmatprep.subr.mxu0 %v937
      %1404 = vmatpush1.msra.mxu0 %v936
      %1405 = vmatprep.subr.mxu0 %v935
      %1406 = vmatpush1.msra.mxu0 %v934
      %1407 = vmatprep.subr.mxu0 %v933
      %1408 = vmatpush1.msra.mxu0 %v932
      %1409 = vmatprep.subr.mxu0 %v995
      %1410 = vmatpush2.msra.mxu0 %v994
      %1411 = vmatprep.subr.mxu0 %v993
      %1412 = vmatpush2.msra.mxu0 %v992
      %1413 = vmatprep.subr.mxu0 %v991
      %1414 = vmatpush2.msra.mxu0 %v990
      %1415 = vmatprep.subr.mxu0 %v989
      %1416 = vmatpush2.msra.mxu0 %v988
      %1417 = vmatprep.subr.mxu0 %v987
      %1418 = vmatpush2.msra.mxu0 %v986
      %1419 = vmatprep.subr.mxu0 %v985
      %1420 = vmatpush2.msra.mxu0 %v984
      %1421 = vmatprep.subr.mxu0 %v983
      %1422 = vmatpush2.msra.mxu0 %v982
      %1423 = vmatprep.subr.mxu0 %v981
      %1424 = vmatpush2.msra.mxu0 %v980
      %1425 = vmatprep.subr.mxu0 %v979
      %1426 = vmatpush2.msra.mxu0 %v978
      %1427 = vmatprep.subr.mxu0 %v977
      %1428 = vmatpush2.msra.mxu0 %v976
      %1429 = vmatprep.subr.mxu0 %v975
      %1430 = vmatpush2.msra.mxu0 %v974
      %1431 = vmatprep.subr.mxu0 %v973
      %1432 = vmatpush2.msra.mxu0 %v972
      %1433 = vmatprep.subr.mxu0 %v971
      %1434 = vmatpush2.msra.mxu0 %v970
      %1435 = vmatprep.subr.mxu0 %v969
      %1436 = vmatpush2.msra.mxu0 %v968
      %1437 = vmatprep.subr.mxu0 %v967
      %1438 = vmatpush2.msra.mxu0 %v966
      %1439 = vmatprep.subr.mxu0 %v965
      %1440 = vmatpush2.msra.mxu0 %v964
      %1441 = vmatprep.mubr.f32.mxu0 %v1375
      %1442 = vmatmul.mubr.f32.gmra.mxu0 %v1373
      %v1443 = vpop.f32.mrf.mxu0
      %v1444 = vadd.f32 0.0, %v1443
      %v1445 = vpop.f32.mrf.mxu0
      %v1446 = vadd.f32 0.0, %v1445
      %1447 = vdwg.mxu0
      %v1450 = vcombine.low %v1444, %v1446
      %v1452 = vadd.f32 %v883, %v1450
      %v1454 = vcombine.high %v1452, %v1452
      %v1456 = vsel %vm887, %v1452, -inf
      %v1457 = vrot.slane %v1456, 4
      %v1458 = vmax.f32 %v1456, %v1457
      %v1459 = vrot.slane %v1458, 2
      %v1460 = vmax.f32 %v1458, %v1459
      %v1461 = vrot.slane %v1460, 1
      %v1462 = vmax.f32 %v1460, %v1461
      %v1463 = vsel %vm887, %v1454, -inf
      %v1464 = vrot.slane %v1463, 4
      %v1465 = vmax.f32 %v1463, %v1464
      %v1466 = vrot.slane %v1465, 2
      %v1467 = vmax.f32 %v1465, %v1466
      %v1468 = vrot.slane %v1467, 1
      %v1469 = vmax.f32 %v1467, %v1468
      %v1472 = vcombine.low %v1462, %v1469
      %v1474 = vsub.f32 %v1452, %v1472
      %v1475 = vmul.f32 %v1474, 1.442695
      %v1476 = vpow.pop %v1475
      %v1478 = vcombine.high %v1476, %v1476
      %v1480 = vsel %vm887, %v1476, 0.0
      %v1481 = vrot.slane %v1480, 4
      %v1482 = vadd.f32 %v1480, %v1481
      %v1483 = vrot.slane %v1482, 2
      %v1484 = vadd.f32 %v1482, %v1483
      %v1485 = vrot.slane %v1484, 1
      %v1486 = vadd.f32 %v1484, %v1485
      %v1487 = vsel %vm887, %v1478, 0.0
      %v1488 = vrot.slane %v1487, 4
      %v1489 = vadd.f32 %v1487, %v1488
      %v1490 = vrot.slane %v1489, 2
      %v1491 = vadd.f32 %v1489, %v1490
      %v1492 = vrot.slane %v1491, 1
      %v1493 = vadd.f32 %v1491, %v1492
      %v1496 = vcombine.low %v1486, %v1493
      %v1498 = vrcp.pop %v1496
      %v1499 = vmul.f32 %v1476, %v1498
      %v1501 = vcombine.high %v1499, %v1499
      %1503 = vmatprep.subr.mxu0 %v963
      %1504 = vmatpush1.msra.mxu0 %v962
      %1505 = vmatprep.subr.mxu0 %v961
      %1506 = vmatpush1.msra.mxu0 %v960
      %1507 = vmatprep.subr.mxu0 %v959
      %1508 = vmatpush1.msra.mxu0 %v958
      %1509 = vmatprep.subr.mxu0 %v957
      %1510 = vmatpush1.msra.mxu0 %v956
      %1511 = vmatprep.subr.mxu0 %v955
      %1512 = vmatpush1.msra.mxu0 %v954
      %1513 = vmatprep.subr.mxu0 %v953
      %1514 = vmatpush1.msra.mxu0 %v952
      %1515 = vmatprep.subr.mxu0 %v951
      %1516 = vmatpush1.msra.mxu0 %v950
      %1517 = vmatprep.subr.mxu0 %v949
      %1518 = vmatpush1.msra.mxu0 %v948
      %1519 = vmatprep.subr.mxu0 %v947
      %1520 = vmatpush1.msra.mxu0 %v946
      %1521 = vmatprep.subr.mxu0 %v945
      %1522 = vmatpush1.msra.mxu0 %v944
      %1523 = vmatprep.subr.mxu0 %v943
      %1524 = vmatpush1.msra.mxu0 %v942
      %1525 = vmatprep.subr.mxu0 %v941
      %1526 = vmatpush1.msra.mxu0 %v940
      %1527 = vmatprep.subr.mxu0 %v939
      %1528 = vmatpush1.msra.mxu0 %v938
      %1529 = vmatprep.subr.mxu0 %v937
      %1530 = vmatpush1.msra.mxu0 %v936
      %1531 = vmatprep.subr.mxu0 %v935
      %1532 = vmatpush1.msra.mxu0 %v934
      %1533 = vmatprep.subr.mxu0 %v933
      %1534 = vmatpush1.msra.mxu0 %v932
      %1535 = vmatprep.subr.mxu0 %v995
      %1536 = vmatpush2.msra.mxu0 %v994
      %1537 = vmatprep.subr.mxu0 %v993
      %1538 = vmatpush2.msra.mxu0 %v992
      %1539 = vmatprep.subr.mxu0 %v991
      %1540 = vmatpush2.msra.mxu0 %v990
      %1541 = vmatprep.subr.mxu0 %v989
      %1542 = vmatpush2.msra.mxu0 %v988
      %1543 = vmatprep.subr.mxu0 %v987
      %1544 = vmatpush2.msra.mxu0 %v986
      %1545 = vmatprep.subr.mxu0 %v985
      %1546 = vmatpush2.msra.mxu0 %v984
      %1547 = vmatprep.subr.mxu0 %v983
      %1548 = vmatpush2.msra.mxu0 %v982
      %1549 = vmatprep.subr.mxu0 %v981
      %1550 = vmatpush2.msra.mxu0 %v980
      %1551 = vmatprep.subr.mxu0 %v979
      %1552 = vmatpush2.msra.mxu0 %v978
      %1553 = vmatprep.subr.mxu0 %v977
      %1554 = vmatpush2.msra.mxu0 %v976
      %1555 = vmatprep.subr.mxu0 %v975
      %1556 = vmatpush2.msra.mxu0 %v974
      %1557 = vmatprep.subr.mxu0 %v973
      %1558 = vmatpush2.msra.mxu0 %v972
      %1559 = vmatprep.subr.mxu0 %v971
      %1560 = vmatpush2.msra.mxu0 %v970
      %1561 = vmatprep.subr.mxu0 %v969
      %1562 = vmatpush2.msra.mxu0 %v968
      %1563 = vmatprep.subr.mxu0 %v967
      %1564 = vmatpush2.msra.mxu0 %v966
      %1565 = vmatprep.subr.mxu0 %v965
      %1566 = vmatpush2.msra.mxu0 %v964
      %1567 = vmatprep.mubr.f32.mxu0 %v1501
      %1568 = vmatmul.mubr.f32.gmra.mxu0 %v1499
      %v1569 = vpop.f32.mrf.mxu0
      %v1570 = vadd.f32 0.0, %v1569
      %v1571 = vpop.f32.mrf.mxu0
      %v1572 = vadd.f32 0.0, %v1571
      %1573 = vdwg.mxu0
      %v1576 = vcombine.low %v1570, %v1572
      %v1578 = vadd.f32 %v883, %v1576
      %v1580 = vcombine.high %v1578, %v1578
      %v1582 = vsel %vm887, %v1578, -inf
      %v1583 = vrot.slane %v1582, 4
      %v1584 = vmax.f32 %v1582, %v1583
      %v1585 = vrot.slane %v1584, 2
      %v1586 = vmax.f32 %v1584, %v1585
      %v1587 = vrot.slane %v1586, 1
      %v1588 = vmax.f32 %v1586, %v1587
      %v1589 = vsel %vm887, %v1580, -inf
      %v1590 = vrot.slane %v1589, 4
      %v1591 = vmax.f32 %v1589, %v1590
      %v1592 = vrot.slane %v1591, 2
      %v1593 = vmax.f32 %v1591, %v1592
      %v1594 = vrot.slane %v1593, 1
      %v1595 = vmax.f32 %v1593, %v1594
      %v1598 = vcombine.low %v1588, %v1595
      %v1600 = vsub.f32 %v1578, %v1598
      %v1601 = vmul.f32 %v1600, 1.442695
      %v1602 = vpow.pop %v1601
      %v1604 = vcombine.high %v1602, %v1602
      %v1606 = vsel %vm887, %v1602, 0.0
      %v1607 = vrot.slane %v1606, 4
      %v1608 = vadd.f32 %v1606, %v1607
      %v1609 = vrot.slane %v1608, 2
      %v1610 = vadd.f32 %v1608, %v1609
      %v1611 = vrot.slane %v1610, 1
      %v1612 = vadd.f32 %v1610, %v1611
      %v1613 = vsel %vm887, %v1604, 0.0
      %v1614 = vrot.slane %v1613, 4
      %v1615 = vadd.f32 %v1613, %v1614
      %v1616 = vrot.slane %v1615, 2
      %v1617 = vadd.f32 %v1615, %v1616
      %v1618 = vrot.slane %v1617, 1
      %v1619 = vadd.f32 %v1617, %v1618
      %v1622 = vcombine.low %v1612, %v1619
      %v1624 = vrcp.pop %v1622
      %v1625 = vmul.f32 %v1602, %v1624
      %1626 = vst [vmem:[%s237] sm:$0xff] %v1625
      %p1627 = scmp.lt.s32.totalorder %s15, 1
      %s1628 = scalar_select %p1627, %s15, 1
      %s1629 = smul.addr %s1628, 2
      %s1630 = smul.addr %s1629, 4
      %s1631 = scalar_lea.vmem %s4, %s1630
      // Predicated region
      $region37: #{crf_forward.1} parent=35 // pred_check
        %p1632 = pneg %p132
      $region38: #{crf_forward.1} parent=35 // pred_check_branch
        %1634 = sbr.rel (%p1632) target = $region40
      $region39: #{crf_forward.1} parent=35 // pred_region
        _
      $region40: #{crf_forward.1} parent=35 // pred_fallthru
        _
    $region36: #{crf_forward.1} parent=5 // pred_fallthru
      _
    %p1635 = scmp.le.s32.totalorder 2, %s10
    // Predicated region
    $region41: #{crf_forward.1} parent=5 // pred_check
      %p1636 = pneg %p1635
    $region42: #{crf_forward.1} parent=5 // pred_check_branch
      %1638 = sbr.rel (%p1636) target = $region44
    $region43: #{crf_forward.1} parent=5 // pred_region
      %s1639 = ssub.s32 %s10, 2
      // Predicated region
      $region45: #{crf_forward.1} parent=43 // pred_check
        %p1640 = pneg %p138
      $region46: #{crf_forward.1} parent=43 // pred_check_branch
        %1642 = sbr.rel (%p1640) target = $region48
      $region47: #{crf_forward.1} parent=43 // pred_region
        %p1643 = scmp.lt.s32.totalorder %s16, 1
        %s1644 = scalar_select %p1643, %s16, 1
        %s1645 = smul.addr %s1644, 2
        %s1646 = smul.addr %s1645, 4
        %s1647 = scalar_lea.vmem %s4, %s1646
      $region48: #{crf_forward.1} parent=43 // pred_fallthru
        _
    $region44: #{crf_forward.1} parent=5 // pred_fallthru
      _
  $region6: #{crf_forward.1} parent=0 // loop_footer
    %s14 = sadd.s32 1, %s10
  $region7: #{crf_forward.1} parent=0 // loop_footer_branch
    %9 = sbr.rel target = $region3
  $region8: #{crf_forward.1} parent=0 // loop_exit
    _

</llo_original>
